<compile_context>
chip_gen: v6e
topology: v6e:2x2x1
jax: 0.10.0
libtpu: 0.0.40
codegen_flags: <defaults>
</compile_context>

<pallas_src>
import math
import jax
import jax.numpy as jnp
from jax.experimental import pallas as pl
from jax.experimental.pallas import tpu as pltpu

# Small, forward-consistent shapes
S, B, D = 8, 2, 32            # seq_len, batch, num_mfcc_feature (d_model)
BS = B * S                    # batch-major activation slab rows
NHEAD, HD = 4, D // 4         # heads, head_dim
D_HID = 64                    # feed-forward hidden
NLAYERS = 2
NUM_CLASS = 3
EPS = 1e-5                    # LayerNorm eps (PyTorch default)

LANES = 128                   # lane-padded slab width
G = NHEAD * B                 # (head, batch) groups fused into one attention problem
GS = G * S                    # rows of the fused block-diagonal attention

# per-layer packed weight-slab rows (weights pre-transposed to [in, out], zero padded to 128 lanes)
R_IN = 0                      # [D, 3D]    qkv in_proj (Q part pre-scaled by 1/sqrt(HD))
R_OUT = D                     # [D, D]     attention out_proj
R_L1 = 2 * D                  # [D, D_HID] FFN linear1
R_L2 = 3 * D                  # [128, D]   FFN linear2 in a full 128-row block (rows D_HID: zero)
R_B = 3 * D + LANES           # 8 bias / LayerNorm rows
W_ROWS = R_B + 8              # 232

# aux slab rows (pe + fused mask + decoder packed into one DMA)
A_PE = 0                      # [BS, D]   positional encoding pre-tiled over batch
A_MASK = BS                   # [GS, GS]  block-diagonal (head,batch) additive mask
A_DECW = BS + GS              # [D, 128]  decoder weight (classes in lanes 0:NUM_CLASS)
A_DECB = A_DECW + D           # [1, 128]  decoder bias
AUX_ROWS = 120


def _layer_norm(x, w, b):
    # x is [BS, D]; w, b are [1, D].  Divide-by-D folded into constant multiplies.
    mu = jnp.sum(x, axis=-1, keepdims=True) * (1.0 / D)
    xc = x - mu
    var = jnp.sum(xc * xc, axis=-1, keepdims=True) * (1.0 / D)
    return xc * jax.lax.rsqrt(var + EPS) * w + b


def transformer_kernel(src_ref, w_ref, aux_ref, out_ref):
    # positional encoding pre-tiled on host -> single shape-matched add
    x = src_ref[...] + aux_ref[A_PE:A_PE + BS, 0:D]                      # [BS, D]
    # block-diagonal additive mask for all (head, batch) groups, loaded once
    mask_big = aux_ref[A_MASK:A_MASK + GS, 0:GS]                         # [GS, GS]

    for l in range(NLAYERS):                                             # post-norm layer, ReLU FFN
        wl = w_ref.at[l]                                                 # [W_ROWS, 128] ref view

        # ---- QKV projection at full 128-lane width (lanes 3D:128 of the slab are zero) ----
        qkv = jnp.dot(x, wl[R_IN:R_IN + D, :],
                      preferred_element_type=jnp.float32) + wl[R_B:R_B + 1, :]   # [BS, 128]

        # fold heads into the sublane dim: rows ordered (head, batch, seq)
        Qc = jnp.concatenate([qkv[:, h * HD:(h + 1) * HD] for h in range(NHEAD)], axis=0)
        Kc = jnp.concatenate([qkv[:, D + h * HD:D + (h + 1) * HD] for h in range(NHEAD)], axis=0)
        Vc = jnp.concatenate([qkv[:, 2 * D + h * HD:2 * D + (h + 1) * HD] for h in range(NHEAD)], axis=0)

        # ---- fused attention: ONE score matmul / softmax / value matmul for all heads & batches ----
        s = jnp.einsum('qd,kd->qk', Qc, Kc, preferred_element_type=jnp.float32) + mask_big
        s = s - jnp.max(s, axis=-1, keepdims=True)
        p = jnp.exp(s)                                                   # off-block entries -> exactly 0
        p = p * pl.reciprocal(jnp.sum(p, axis=-1, keepdims=True), approx=True)
        o = jnp.dot(p, Vc, preferred_element_type=jnp.float32)           # [GS, HD]

        # ---- output projection: per-head row blocks of the pre-transposed weight, then head-sum ----
        o3 = o.reshape(NHEAD, BS, HD)
        w_out = wl[R_OUT:R_OUT + D, :].reshape(NHEAD, HD, LANES)
        attn = jnp.sum(jnp.einsum('hbd,hdo->hbo', o3, w_out,
                                  preferred_element_type=jnp.float32), axis=0)
        attn = attn + wl[R_B + 1:R_B + 2, :]                             # [BS, 128]; lanes D: are zero

        # residual + norm1 (LayerNorm over exactly D active lanes)
        x = _layer_norm(x + attn[:, 0:D],
                        wl[R_B + 4:R_B + 5, 0:D], wl[R_B + 5:R_B + 6, 0:D])

        # ---- feed-forward at full 128-lane width ----
        h1 = jnp.dot(x, wl[R_L1:R_L1 + D, :],
                     preferred_element_type=jnp.float32) + wl[R_B + 2:R_B + 3, :]
        h1 = jnp.maximum(h1, 0.0)                                        # lanes D_HID:128 stay exactly 0
        h2 = jnp.dot(h1, wl[R_L2:R_L2 + LANES, :],
                     preferred_element_type=jnp.float32) + wl[R_B + 3:R_B + 4, :]

        # residual + norm2
        x = _layer_norm(x + h2[:, 0:D],
                        wl[R_B + 6:R_B + 7, 0:D], wl[R_B + 7:R_B + 8, 0:D])

    # mean over seq per batch element, then lane-dense decoder matmul
    pooled = jnp.sum(x.reshape(B, S, D), axis=1) * (1.0 / S)             # [B, D]
    logits = jnp.dot(pooled, aux_ref[A_DECW:A_DECW + D, :],
                     preferred_element_type=jnp.float32) + aux_ref[A_DECB:A_DECB + 1, :]
    out_ref[...] = logits                                                # [B, 128]; classes in lanes 0:NUM_CLASS


def pack_weights(p):
    """Pre-transpose weights to [in, out], fold the 1/sqrt(HD) scale into Q, pack into one slab."""
    f32 = jnp.float32
    scale = 1.0 / math.sqrt(HD)
    in_w = p['in_w'].at[:, 0:D, :].multiply(scale)        # Q rows of in_proj
    in_b = p['in_b'].at[:, 0:D].multiply(scale)

    w = jnp.zeros((NLAYERS, W_ROWS, LANES), f32)
    w = w.at[:, R_IN:R_IN + D, 0:3 * D].set(jnp.transpose(in_w, (0, 2, 1)))
    w = w.at[:, R_OUT:R_OUT + D, 0:D].set(jnp.transpose(p['out_w'], (0, 2, 1)))
    w = w.at[:, R_L1:R_L1 + D, 0:D_HID].set(jnp.transpose(p['l1_w'], (0, 2, 1)))
    w = w.at[:, R_L2:R_L2 + D_HID, 0:D].set(jnp.transpose(p['l2_w'], (0, 2, 1)))
    w = w.at[:, R_B + 0, 0:3 * D].set(in_b)
    w = w.at[:, R_B + 1, 0:D].set(p['out_b'])
    w = w.at[:, R_B + 2, 0:D_HID].set(p['l1_b'])
    w = w.at[:, R_B + 3, 0:D].set(p['l2_b'])
    w = w.at[:, R_B + 4, 0:D].set(p['n1_w'])
    w = w.at[:, R_B + 5, 0:D].set(p['n1_b'])
    w = w.at[:, R_B + 6, 0:D].set(p['n2_w'])
    w = w.at[:, R_B + 7, 0:D].set(p['n2_b'])
    return w


def pack_aux(p, src_mask):
    """pe (tiled over batch), block-diagonal fused attention mask and decoder in one slab."""
    f32 = jnp.float32
    aux = jnp.zeros((AUX_ROWS, LANES), f32)
    pe = p['pe'][:, 0, :]                                  # [S, D]
    aux = aux.at[A_PE:A_PE + BS, 0:D].set(jnp.tile(pe, (B, 1)))
    # diagonal (head,batch) blocks carry the user's additive mask; off-blocks get -1e9 so the
    # fused softmax / P@V reproduce independent per-head attention exactly.
    blk = jnp.kron(jnp.eye(G, dtype=f32), jnp.ones((S, S), f32))
    big = jnp.where(blk > 0, jnp.tile(src_mask.astype(f32), (G, G)), -1e9)
    aux = aux.at[A_MASK:A_MASK + GS, 0:GS].set(big)
    aux = aux.at[A_DECW:A_DECW + D, 0:NUM_CLASS].set(p['dec_w'].T)
    aux = aux.at[A_DECB, 0:NUM_CLASS].set(p['dec_b'])
    return aux


def transformer_forward(src, src_mask, params):
    # host-side layout prep: batch-major activation slab + 2 packed parameter slabs (3 input DMAs)
    src2 = jnp.transpose(src, (1, 0, 2)).reshape(BS, D)    # [B*S, D]
    wslab = pack_weights(params)
    aux = pack_aux(params, src_mask)

    # Gridless on purpose: at B=2 / BS=16 the kernel is issue/latency-bound; a batch grid
    # (including a v7x 2-TensorCore split) only adds per-step and duplicated-DMA fixed cost.
    out = pl.pallas_call(
        transformer_kernel,
        out_shape=jax.ShapeDtypeStruct((B, LANES), jnp.float32),
        in_specs=[pl.BlockSpec(memory_space=pltpu.MemorySpace.VMEM)] * 3,
        out_specs=pl.BlockSpec(memory_space=pltpu.MemorySpace.VMEM),
    )(src2, wslab, aux)
    return out[:, :NUM_CLASS]                              # [B, NUM_CLASS]


def make_params(key):
    ks = jax.random.split(key, 8)
    f32 = jnp.float32
    params = {
        # per-layer params stacked over the layer dim (PyTorch [out, in] layout)
        'in_w':  0.05 * jax.random.normal(ks[0], (NLAYERS, 3 * D, D), f32),
        'in_b':  jnp.zeros((NLAYERS, 3 * D), f32),
        'out_w': 0.05 * jax.random.normal(ks[1], (NLAYERS, D, D), f32),
        'out_b': jnp.zeros((NLAYERS, D), f32),
        'l1_w':  0.05 * jax.random.normal(ks[2], (NLAYERS, D_HID, D), f32),
        'l1_b':  jnp.zeros((NLAYERS, D_HID), f32),
        'l2_w':  0.05 * jax.random.normal(ks[3], (NLAYERS, D, D_HID), f32),
        'l2_b':  jnp.zeros((NLAYERS, D), f32),
        'n1_w':  jnp.ones((NLAYERS, D), f32),
        'n1_b':  jnp.zeros((NLAYERS, D), f32),
        'n2_w':  jnp.ones((NLAYERS, D), f32),
        'n2_b':  jnp.zeros((NLAYERS, D), f32),
        # decoder: uniform(-0.1, 0.1) weight, zero bias (matches init_weights)
        'dec_w': jax.random.uniform(ks[4], (NUM_CLASS, D), f32, -0.1, 0.1),
        'dec_b': jnp.zeros((NUM_CLASS,), f32),
    }
    # sinusoidal positional encoding: pe[:, 0, 0::2]=sin, pe[:, 0, 1::2]=cos
    position = jnp.arange(S, dtype=f32)[:, None]
    div_term = jnp.exp(jnp.arange(0, D, 2, dtype=f32) * (-math.log(10000.0) / D))
    angles = position * div_term                           # [S, D/2]
    pe = jnp.stack([jnp.sin(angles), jnp.cos(angles)], axis=-1).reshape(S, D)
    params['pe'] = pe[:, None, :]                          # [S, 1, D]
    return params


if __name__ == "__main__":
    key = jax.random.PRNGKey(0)
    k_src, k_par = jax.random.split(key)

    src = jax.random.normal(k_src, (S, B, D), jnp.float32)  # [seq, batch, d_model]
    # causal additive float mask (0 on/below diag, large negative above)
    src_mask = jnp.where(jnp.tril(jnp.ones((S, S), bool)), 0.0, -1e9).astype(jnp.float32)

    params = make_params(k_par)

    out = transformer_forward(src, src_mask, params)
    out = jax.block_until_ready(out)
    assert out.shape == (B, NUM_CLASS) and jnp.all(jnp.isfinite(out))
    print("KERNEL_OK")
</pallas_src>

<mosaic_0001>
module attributes {stable_mosaic.version = 11 : i64} {
  func.func @transformer_kernel(%arg0: memref<16x32xf32, #tpu.memory_space<vmem>>, %arg1: memref<2x232x128xf32, #tpu.memory_space<vmem>>, %arg2: memref<120x128xf32, #tpu.memory_space<vmem>>, %arg3: memref<2x128xf32, #tpu.memory_space<vmem>>) attributes {dimension_semantics = [], scalar_prefetch = 0 : i64, scratch_operands = 0 : i64, tpu.core_type = #tpu.core_type<tc>} {
    %c0 = arith.constant 0 : index
    %c0_0 = arith.constant 0 : index
    %0 = vector.load %arg0[%c0, %c0_0] : memref<16x32xf32, #tpu.memory_space<vmem>>, vector<16x32xf32>
    %c0_1 = arith.constant 0 : index
    %c0_2 = arith.constant 0 : index
    %1 = vector.load %arg2[%c0_1, %c0_2] : memref<120x128xf32, #tpu.memory_space<vmem>>, vector<16x32xf32>
    %2 = arith.addf %0, %1 : vector<16x32xf32>
    %c16 = arith.constant 16 : index
    %c0_3 = arith.constant 0 : index
    %3 = vector.load %arg2[%c16, %c0_3] : memref<120x128xf32, #tpu.memory_space<vmem>>, vector<64x64xf32>
    %c0_i32 = arith.constant 0 : i32
    %c0_i32_4 = arith.constant 0 : i32
    %c0_i32_5 = arith.constant 0 : i32
    %4 = tpu.memref_slice %arg1[%c0_i32, %c0_i32_4, %c0_i32_5] : memref<2x232x128xf32, #tpu.memory_space<vmem>> -> memref<1x232x128xf32, #tpu.memory_space<vmem>>
    %5 = tpu.memref_squeeze %4 : memref<1x232x128xf32, #tpu.memory_space<vmem>> -> memref<232x128xf32, #tpu.memory_space<vmem>>
    %c0_6 = arith.constant 0 : index
    %c0_7 = arith.constant 0 : index
    %6 = vector.load %5[%c0_6, %c0_7] : memref<232x128xf32, #tpu.memory_space<vmem>>, vector<32x128xf32>
    %cst = arith.constant dense<0.000000e+00> : vector<16x128xf32>
    %7 = tpu.matmul %2, %6, %cst {dimension_numbers = #tpu.dot_dimension_numbers<[1], [0], [0], [1], [0, 0, 1, 1], [], []>} : vector<16x32xf32>, vector<32x128xf32>, vector<16x128xf32> -> vector<16x128xf32>
    %c0_i32_8 = arith.constant 0 : i32
    %c0_i32_9 = arith.constant 0 : i32
    %c0_i32_10 = arith.constant 0 : i32
    %8 = tpu.memref_slice %arg1[%c0_i32_8, %c0_i32_9, %c0_i32_10] : memref<2x232x128xf32, #tpu.memory_space<vmem>> -> memref<1x232x128xf32, #tpu.memory_space<vmem>>
    %9 = tpu.memref_squeeze %8 : memref<1x232x128xf32, #tpu.memory_space<vmem>> -> memref<232x128xf32, #tpu.memory_space<vmem>>
    %c224 = arith.constant 224 : index
    %c0_11 = arith.constant 0 : index
    %10 = vector.load %9[%c224, %c0_11] : memref<232x128xf32, #tpu.memory_space<vmem>>, vector<1x128xf32>
    %11 = vector.broadcast %10 : vector<1x128xf32> to vector<16x128xf32>
    %12 = arith.addf %7, %11 : vector<16x128xf32>
    %13 = vector.extract_strided_slice %12 {offsets = [0, 0], sizes = [16, 8], strides = [1, 1]} : vector<16x128xf32> to vector<16x8xf32>
    %14 = vector.extract_strided_slice %12 {offsets = [0, 8], sizes = [16, 8], strides = [1, 1]} : vector<16x128xf32> to vector<16x8xf32>
    %15 = vector.extract_strided_slice %12 {offsets = [0, 16], sizes = [16, 8], strides = [1, 1]} : vector<16x128xf32> to vector<16x8xf32>
    %16 = vector.extract_strided_slice %12 {offsets = [0, 24], sizes = [16, 8], strides = [1, 1]} : vector<16x128xf32> to vector<16x8xf32>
    %17 = tpu.concatenate %13, %14, %15, %16 in 0 : vector<16x8xf32>, vector<16x8xf32>, vector<16x8xf32>, vector<16x8xf32> -> vector<64x8xf32>
    %18 = vector.extract_strided_slice %12 {offsets = [0, 32], sizes = [16, 8], strides = [1, 1]} : vector<16x128xf32> to vector<16x8xf32>
    %19 = vector.extract_strided_slice %12 {offsets = [0, 40], sizes = [16, 8], strides = [1, 1]} : vector<16x128xf32> to vector<16x8xf32>
    %20 = vector.extract_strided_slice %12 {offsets = [0, 48], sizes = [16, 8], strides = [1, 1]} : vector<16x128xf32> to vector<16x8xf32>
    %21 = vector.extract_strided_slice %12 {offsets = [0, 56], sizes = [16, 8], strides = [1, 1]} : vector<16x128xf32> to vector<16x8xf32>
    %22 = tpu.concatenate %18, %19, %20, %21 in 0 : vector<16x8xf32>, vector<16x8xf32>, vector<16x8xf32>, vector<16x8xf32> -> vector<64x8xf32>
    %23 = vector.extract_strided_slice %12 {offsets = [0, 64], sizes = [16, 8], strides = [1, 1]} : vector<16x128xf32> to vector<16x8xf32>
    %24 = vector.extract_strided_slice %12 {offsets = [0, 72], sizes = [16, 8], strides = [1, 1]} : vector<16x128xf32> to vector<16x8xf32>
    %25 = vector.extract_strided_slice %12 {offsets = [0, 80], sizes = [16, 8], strides = [1, 1]} : vector<16x128xf32> to vector<16x8xf32>
    %26 = vector.extract_strided_slice %12 {offsets = [0, 88], sizes = [16, 8], strides = [1, 1]} : vector<16x128xf32> to vector<16x8xf32>
    %27 = tpu.concatenate %23, %24, %25, %26 in 0 : vector<16x8xf32>, vector<16x8xf32>, vector<16x8xf32>, vector<16x8xf32> -> vector<64x8xf32>
    "tpu.trace_start"() <{level = 10 : i32, message = "qd,kd->qk"}> : () -> ()
    %cst_12 = arith.constant dense<0.000000e+00> : vector<64x64xf32>
    %28 = tpu.matmul %17, %22, %cst_12 {dimension_numbers = #tpu.dot_dimension_numbers<[1], [1], [0], [0], [0, 0, 1, 0], [], []>} : vector<64x8xf32>, vector<64x8xf32>, vector<64x64xf32> -> vector<64x64xf32>
    "tpu.trace_stop"() : () -> ()
    %29 = arith.addf %28, %3 : vector<64x64xf32>
    %cst_13 = arith.constant dense<0xFF800000> : vector<64xf32>
    %30 = vector.multi_reduction <maximumf>, %29, %cst_13 [1] : vector<64x64xf32> to vector<64xf32>
    %31 = vector.shape_cast %30 : vector<64xf32> to vector<64x1xf32>
    %32 = vector.broadcast %31 : vector<64x1xf32> to vector<64x64xf32>
    %33 = arith.subf %29, %32 : vector<64x64xf32>
    %34 = math.exp %33 : vector<64x64xf32>
    %cst_14 = arith.constant dense<0.000000e+00> : vector<64xf32>
    %35 = vector.multi_reduction <add>, %34, %cst_14 [1] : vector<64x64xf32> to vector<64xf32>
    %36 = vector.shape_cast %35 : vector<64xf32> to vector<64x1xf32>
    %37 = tpu.reciprocal %36 {approx = true} : vector<64x1xf32> -> vector<64x1xf32>
    %38 = vector.broadcast %37 : vector<64x1xf32> to vector<64x64xf32>
    %39 = arith.mulf %34, %38 : vector<64x64xf32>
    %cst_15 = arith.constant dense<0.000000e+00> : vector<64x8xf32>
    %40 = tpu.matmul %39, %27, %cst_15 {dimension_numbers = #tpu.dot_dimension_numbers<[1], [0], [0], [1], [0, 0, 1, 1], [], []>} : vector<64x64xf32>, vector<64x8xf32>, vector<64x8xf32> -> vector<64x8xf32>
    %41 = vector.shape_cast %40 : vector<64x8xf32> to vector<4x16x8xf32>
    %c0_i32_16 = arith.constant 0 : i32
    %c0_i32_17 = arith.constant 0 : i32
    %c0_i32_18 = arith.constant 0 : i32
    %42 = tpu.memref_slice %arg1[%c0_i32_16, %c0_i32_17, %c0_i32_18] : memref<2x232x128xf32, #tpu.memory_space<vmem>> -> memref<1x232x128xf32, #tpu.memory_space<vmem>>
    %43 = tpu.memref_squeeze %42 : memref<1x232x128xf32, #tpu.memory_space<vmem>> -> memref<232x128xf32, #tpu.memory_space<vmem>>
    %c32 = arith.constant 32 : index
    %c0_19 = arith.constant 0 : index
    %44 = vector.load %43[%c32, %c0_19] : memref<232x128xf32, #tpu.memory_space<vmem>>, vector<32x128xf32>
    %45 = vector.shape_cast %44 : vector<32x128xf32> to vector<4x8x128xf32>
    "tpu.trace_start"() <{level = 10 : i32, message = "hbd,hdo->hbo"}> : () -> ()
    %cst_20 = arith.constant dense<0.000000e+00> : vector<4x16x128xf32>
    %46 = tpu.matmul %41, %45, %cst_20 {dimension_numbers = #tpu.dot_dimension_numbers<[2], [1], [1], [2], [0, 0, 0, 1, 1, 2], [0], [0]>} : vector<4x16x8xf32>, vector<4x8x128xf32>, vector<4x16x128xf32> -> vector<4x16x128xf32>
    "tpu.trace_stop"() : () -> ()
    %cst_21 = arith.constant dense<0.000000e+00> : vector<16x128xf32>
    %47 = vector.multi_reduction <add>, %46, %cst_21 [0] : vector<4x16x128xf32> to vector<16x128xf32>
    %c0_i32_22 = arith.constant 0 : i32
    %c0_i32_23 = arith.constant 0 : i32
    %c0_i32_24 = arith.constant 0 : i32
    %48 = tpu.memref_slice %arg1[%c0_i32_22, %c0_i32_23, %c0_i32_24] : memref<2x232x128xf32, #tpu.memory_space<vmem>> -> memref<1x232x128xf32, #tpu.memory_space<vmem>>
    %49 = tpu.memref_squeeze %48 : memref<1x232x128xf32, #tpu.memory_space<vmem>> -> memref<232x128xf32, #tpu.memory_space<vmem>>
    %c225 = arith.constant 225 : index
    %c0_25 = arith.constant 0 : index
    %50 = vector.load %49[%c225, %c0_25] : memref<232x128xf32, #tpu.memory_space<vmem>>, vector<1x128xf32>
    %51 = vector.broadcast %50 : vector<1x128xf32> to vector<16x128xf32>
    %52 = arith.addf %47, %51 : vector<16x128xf32>
    %53 = vector.extract_strided_slice %52 {offsets = [0, 0], sizes = [16, 32], strides = [1, 1]} : vector<16x128xf32> to vector<16x32xf32>
    %54 = arith.addf %2, %53 : vector<16x32xf32>
    %c0_i32_26 = arith.constant 0 : i32
    %c0_i32_27 = arith.constant 0 : i32
    %c0_i32_28 = arith.constant 0 : i32
    %55 = tpu.memref_slice %arg1[%c0_i32_26, %c0_i32_27, %c0_i32_28] : memref<2x232x128xf32, #tpu.memory_space<vmem>> -> memref<1x232x128xf32, #tpu.memory_space<vmem>>
    %56 = tpu.memref_squeeze %55 : memref<1x232x128xf32, #tpu.memory_space<vmem>> -> memref<232x128xf32, #tpu.memory_space<vmem>>
    %c228 = arith.constant 228 : index
    %c0_29 = arith.constant 0 : index
    %57 = vector.load %56[%c228, %c0_29] : memref<232x128xf32, #tpu.memory_space<vmem>>, vector<1x32xf32>
    %c0_i32_30 = arith.constant 0 : i32
    %c0_i32_31 = arith.constant 0 : i32
    %c0_i32_32 = arith.constant 0 : i32
    %58 = tpu.memref_slice %arg1[%c0_i32_30, %c0_i32_31, %c0_i32_32] : memref<2x232x128xf32, #tpu.memory_space<vmem>> -> memref<1x232x128xf32, #tpu.memory_space<vmem>>
    %59 = tpu.memref_squeeze %58 : memref<1x232x128xf32, #tpu.memory_space<vmem>> -> memref<232x128xf32, #tpu.memory_space<vmem>>
    %c229 = arith.constant 229 : index
    %c0_33 = arith.constant 0 : index
    %60 = vector.load %59[%c229, %c0_33] : memref<232x128xf32, #tpu.memory_space<vmem>>, vector<1x32xf32>
    %cst_34 = arith.constant dense<0.000000e+00> : vector<16xf32>
    %61 = vector.multi_reduction <add>, %54, %cst_34 [1] : vector<16x32xf32> to vector<16xf32>
    %62 = vector.shape_cast %61 : vector<16xf32> to vector<16x1xf32>
    %cst_35 = arith.constant 3.125000e-02 : f32
    %63 = vector.broadcast %cst_35 : f32 to vector<16x1xf32>
    %64 = arith.mulf %62, %63 : vector<16x1xf32>
    %65 = vector.broadcast %64 : vector<16x1xf32> to vector<16x32xf32>
    %66 = arith.subf %54, %65 : vector<16x32xf32>
    %67 = arith.mulf %66, %66 : vector<16x32xf32>
    %cst_36 = arith.constant dense<0.000000e+00> : vector<16xf32>
    %68 = vector.multi_reduction <add>, %67, %cst_36 [1] : vector<16x32xf32> to vector<16xf32>
    %69 = vector.shape_cast %68 : vector<16xf32> to vector<16x1xf32>
    %cst_37 = arith.constant 3.125000e-02 : f32
    %70 = vector.broadcast %cst_37 : f32 to vector<16x1xf32>
    %71 = arith.mulf %69, %70 : vector<16x1xf32>
    %cst_38 = arith.constant 9.99999974E-6 : f32
    %72 = vector.broadcast %cst_38 : f32 to vector<16x1xf32>
    %73 = arith.addf %71, %72 : vector<16x1xf32>
    %74 = math.rsqrt %73 : vector<16x1xf32>
    %75 = vector.broadcast %74 : vector<16x1xf32> to vector<16x32xf32>
    %76 = arith.mulf %66, %75 : vector<16x32xf32>
    %77 = vector.broadcast %57 : vector<1x32xf32> to vector<16x32xf32>
    %78 = arith.mulf %76, %77 : vector<16x32xf32>
    %79 = vector.broadcast %60 : vector<1x32xf32> to vector<16x32xf32>
    %80 = arith.addf %78, %79 : vector<16x32xf32>
    %c0_i32_39 = arith.constant 0 : i32
    %c0_i32_40 = arith.constant 0 : i32
    %c0_i32_41 = arith.constant 0 : i32
    %81 = tpu.memref_slice %arg1[%c0_i32_39, %c0_i32_40, %c0_i32_41] : memref<2x232x128xf32, #tpu.memory_space<vmem>> -> memref<1x232x128xf32, #tpu.memory_space<vmem>>
    %82 = tpu.memref_squeeze %81 : memref<1x232x128xf32, #tpu.memory_space<vmem>> -> memref<232x128xf32, #tpu.memory_space<vmem>>
    %c64 = arith.constant 64 : index
    %c0_42 = arith.constant 0 : index
    %83 = vector.load %82[%c64, %c0_42] : memref<232x128xf32, #tpu.memory_space<vmem>>, vector<32x128xf32>
    %cst_43 = arith.constant dense<0.000000e+00> : vector<16x128xf32>
    %84 = tpu.matmul %80, %83, %cst_43 {dimension_numbers = #tpu.dot_dimension_numbers<[1], [0], [0], [1], [0, 0, 1, 1], [], []>} : vector<16x32xf32>, vector<32x128xf32>, vector<16x128xf32> -> vector<16x128xf32>
    %c0_i32_44 = arith.constant 0 : i32
    %c0_i32_45 = arith.constant 0 : i32
    %c0_i32_46 = arith.constant 0 : i32
    %85 = tpu.memref_slice %arg1[%c0_i32_44, %c0_i32_45, %c0_i32_46] : memref<2x232x128xf32, #tpu.memory_space<vmem>> -> memref<1x232x128xf32, #tpu.memory_space<vmem>>
    %86 = tpu.memref_squeeze %85 : memref<1x232x128xf32, #tpu.memory_space<vmem>> -> memref<232x128xf32, #tpu.memory_space<vmem>>
    %c226 = arith.constant 226 : index
    %c0_47 = arith.constant 0 : index
    %87 = vector.load %86[%c226, %c0_47] : memref<232x128xf32, #tpu.memory_space<vmem>>, vector<1x128xf32>
    %88 = vector.broadcast %87 : vector<1x128xf32> to vector<16x128xf32>
    %89 = arith.addf %84, %88 : vector<16x128xf32>
    %cst_48 = arith.constant 0.000000e+00 : f32
    %90 = vector.broadcast %cst_48 : f32 to vector<16x128xf32>
    %91 = arith.maximumf %89, %90 : vector<16x128xf32>
    %c0_i32_49 = arith.constant 0 : i32
    %c0_i32_50 = arith.constant 0 : i32
    %c0_i32_51 = arith.constant 0 : i32
    %92 = tpu.memref_slice %arg1[%c0_i32_49, %c0_i32_50, %c0_i32_51] : memref<2x232x128xf32, #tpu.memory_space<vmem>> -> memref<1x232x128xf32, #tpu.memory_space<vmem>>
    %93 = tpu.memref_squeeze %92 : memref<1x232x128xf32, #tpu.memory_space<vmem>> -> memref<232x128xf32, #tpu.memory_space<vmem>>
    %c96 = arith.constant 96 : index
    %c0_52 = arith.constant 0 : index
    %94 = vector.load %93[%c96, %c0_52] : memref<232x128xf32, #tpu.memory_space<vmem>>, vector<128x128xf32>
    %cst_53 = arith.constant dense<0.000000e+00> : vector<16x128xf32>
    %95 = tpu.matmul %91, %94, %cst_53 {dimension_numbers = #tpu.dot_dimension_numbers<[1], [0], [0], [1], [0, 0, 1, 1], [], []>} : vector<16x128xf32>, vector<128x128xf32>, vector<16x128xf32> -> vector<16x128xf32>
    %c0_i32_54 = arith.constant 0 : i32
    %c0_i32_55 = arith.constant 0 : i32
    %c0_i32_56 = arith.constant 0 : i32
    %96 = tpu.memref_slice %arg1[%c0_i32_54, %c0_i32_55, %c0_i32_56] : memref<2x232x128xf32, #tpu.memory_space<vmem>> -> memref<1x232x128xf32, #tpu.memory_space<vmem>>
    %97 = tpu.memref_squeeze %96 : memref<1x232x128xf32, #tpu.memory_space<vmem>> -> memref<232x128xf32, #tpu.memory_space<vmem>>
    %c227 = arith.constant 227 : index
    %c0_57 = arith.constant 0 : index
    %98 = vector.load %97[%c227, %c0_57] : memref<232x128xf32, #tpu.memory_space<vmem>>, vector<1x128xf32>
    %99 = vector.broadcast %98 : vector<1x128xf32> to vector<16x128xf32>
    %100 = arith.addf %95, %99 : vector<16x128xf32>
    %101 = vector.extract_strided_slice %100 {offsets = [0, 0], sizes = [16, 32], strides = [1, 1]} : vector<16x128xf32> to vector<16x32xf32>
    %102 = arith.addf %80, %101 : vector<16x32xf32>
    %c0_i32_58 = arith.constant 0 : i32
    %c0_i32_59 = arith.constant 0 : i32
    %c0_i32_60 = arith.constant 0 : i32
    %103 = tpu.memref_slice %arg1[%c0_i32_58, %c0_i32_59, %c0_i32_60] : memref<2x232x128xf32, #tpu.memory_space<vmem>> -> memref<1x232x128xf32, #tpu.memory_space<vmem>>
    %104 = tpu.memref_squeeze %103 : memref<1x232x128xf32, #tpu.memory_space<vmem>> -> memref<232x128xf32, #tpu.memory_space<vmem>>
    %c230 = arith.constant 230 : index
    %c0_61 = arith.constant 0 : index
    %105 = vector.load %104[%c230, %c0_61] : memref<232x128xf32, #tpu.memory_space<vmem>>, vector<1x32xf32>
    %c0_i32_62 = arith.constant 0 : i32
    %c0_i32_63 = arith.constant 0 : i32
    %c0_i32_64 = arith.constant 0 : i32
    %106 = tpu.memref_slice %arg1[%c0_i32_62, %c0_i32_63, %c0_i32_64] : memref<2x232x128xf32, #tpu.memory_space<vmem>> -> memref<1x232x128xf32, #tpu.memory_space<vmem>>
    %107 = tpu.memref_squeeze %106 : memref<1x232x128xf32, #tpu.memory_space<vmem>> -> memref<232x128xf32, #tpu.memory_space<vmem>>
    %c231 = arith.constant 231 : index
    %c0_65 = arith.constant 0 : index
    %108 = vector.load %107[%c231, %c0_65] : memref<232x128xf32, #tpu.memory_space<vmem>>, vector<1x32xf32>
    %cst_66 = arith.constant dense<0.000000e+00> : vector<16xf32>
    %109 = vector.multi_reduction <add>, %102, %cst_66 [1] : vector<16x32xf32> to vector<16xf32>
    %110 = vector.shape_cast %109 : vector<16xf32> to vector<16x1xf32>
    %cst_67 = arith.constant 3.125000e-02 : f32
    %111 = vector.broadcast %cst_67 : f32 to vector<16x1xf32>
    %112 = arith.mulf %110, %111 : vector<16x1xf32>
    %113 = vector.broadcast %112 : vector<16x1xf32> to vector<16x32xf32>
    %114 = arith.subf %102, %113 : vector<16x32xf32>
    %115 = arith.mulf %114, %114 : vector<16x32xf32>
    %cst_68 = arith.constant dense<0.000000e+00> : vector<16xf32>
    %116 = vector.multi_reduction <add>, %115, %cst_68 [1] : vector<16x32xf32> to vector<16xf32>
    %117 = vector.shape_cast %116 : vector<16xf32> to vector<16x1xf32>
    %cst_69 = arith.constant 3.125000e-02 : f32
    %118 = vector.broadcast %cst_69 : f32 to vector<16x1xf32>
    %119 = arith.mulf %117, %118 : vector<16x1xf32>
    %cst_70 = arith.constant 9.99999974E-6 : f32
    %120 = vector.broadcast %cst_70 : f32 to vector<16x1xf32>
    %121 = arith.addf %119, %120 : vector<16x1xf32>
    %122 = math.rsqrt %121 : vector<16x1xf32>
    %123 = vector.broadcast %122 : vector<16x1xf32> to vector<16x32xf32>
    %124 = arith.mulf %114, %123 : vector<16x32xf32>
    %125 = vector.broadcast %105 : vector<1x32xf32> to vector<16x32xf32>
    %126 = arith.mulf %124, %125 : vector<16x32xf32>
    %127 = vector.broadcast %108 : vector<1x32xf32> to vector<16x32xf32>
    %128 = arith.addf %126, %127 : vector<16x32xf32>
    %c1_i32 = arith.constant 1 : i32
    %c0_i32_71 = arith.constant 0 : i32
    %c0_i32_72 = arith.constant 0 : i32
    %129 = tpu.memref_slice %arg1[%c1_i32, %c0_i32_71, %c0_i32_72] : memref<2x232x128xf32, #tpu.memory_space<vmem>> -> memref<1x232x128xf32, #tpu.memory_space<vmem>>
    %130 = tpu.memref_squeeze %129 : memref<1x232x128xf32, #tpu.memory_space<vmem>> -> memref<232x128xf32, #tpu.memory_space<vmem>>
    %c0_73 = arith.constant 0 : index
    %c0_74 = arith.constant 0 : index
    %131 = vector.load %130[%c0_73, %c0_74] : memref<232x128xf32, #tpu.memory_space<vmem>>, vector<32x128xf32>
    %cst_75 = arith.constant dense<0.000000e+00> : vector<16x128xf32>
    %132 = tpu.matmul %128, %131, %cst_75 {dimension_numbers = #tpu.dot_dimension_numbers<[1], [0], [0], [1], [0, 0, 1, 1], [], []>} : vector<16x32xf32>, vector<32x128xf32>, vector<16x128xf32> -> vector<16x128xf32>
    %c1_i32_76 = arith.constant 1 : i32
    %c0_i32_77 = arith.constant 0 : i32
    %c0_i32_78 = arith.constant 0 : i32
    %133 = tpu.memref_slice %arg1[%c1_i32_76, %c0_i32_77, %c0_i32_78] : memref<2x232x128xf32, #tpu.memory_space<vmem>> -> memref<1x232x128xf32, #tpu.memory_space<vmem>>
    %134 = tpu.memref_squeeze %133 : memref<1x232x128xf32, #tpu.memory_space<vmem>> -> memref<232x128xf32, #tpu.memory_space<vmem>>
    %c224_79 = arith.constant 224 : index
    %c0_80 = arith.constant 0 : index
    %135 = vector.load %134[%c224_79, %c0_80] : memref<232x128xf32, #tpu.memory_space<vmem>>, vector<1x128xf32>
    %136 = vector.broadcast %135 : vector<1x128xf32> to vector<16x128xf32>
    %137 = arith.addf %132, %136 : vector<16x128xf32>
    %138 = vector.extract_strided_slice %137 {offsets = [0, 0], sizes = [16, 8], strides = [1, 1]} : vector<16x128xf32> to vector<16x8xf32>
    %139 = vector.extract_strided_slice %137 {offsets = [0, 8], sizes = [16, 8], strides = [1, 1]} : vector<16x128xf32> to vector<16x8xf32>
    %140 = vector.extract_strided_slice %137 {offsets = [0, 16], sizes = [16, 8], strides = [1, 1]} : vector<16x128xf32> to vector<16x8xf32>
    %141 = vector.extract_strided_slice %137 {offsets = [0, 24], sizes = [16, 8], strides = [1, 1]} : vector<16x128xf32> to vector<16x8xf32>
    %142 = tpu.concatenate %138, %139, %140, %141 in 0 : vector<16x8xf32>, vector<16x8xf32>, vector<16x8xf32>, vector<16x8xf32> -> vector<64x8xf32>
    %143 = vector.extract_strided_slice %137 {offsets = [0, 32], sizes = [16, 8], strides = [1, 1]} : vector<16x128xf32> to vector<16x8xf32>
    %144 = vector.extract_strided_slice %137 {offsets = [0, 40], sizes = [16, 8], strides = [1, 1]} : vector<16x128xf32> to vector<16x8xf32>
    %145 = vector.extract_strided_slice %137 {offsets = [0, 48], sizes = [16, 8], strides = [1, 1]} : vector<16x128xf32> to vector<16x8xf32>
    %146 = vector.extract_strided_slice %137 {offsets = [0, 56], sizes = [16, 8], strides = [1, 1]} : vector<16x128xf32> to vector<16x8xf32>
    %147 = tpu.concatenate %143, %144, %145, %146 in 0 : vector<16x8xf32>, vector<16x8xf32>, vector<16x8xf32>, vector<16x8xf32> -> vector<64x8xf32>
    %148 = vector.extract_strided_slice %137 {offsets = [0, 64], sizes = [16, 8], strides = [1, 1]} : vector<16x128xf32> to vector<16x8xf32>
    %149 = vector.extract_strided_slice %137 {offsets = [0, 72], sizes = [16, 8], strides = [1, 1]} : vector<16x128xf32> to vector<16x8xf32>
    %150 = vector.extract_strided_slice %137 {offsets = [0, 80], sizes = [16, 8], strides = [1, 1]} : vector<16x128xf32> to vector<16x8xf32>
    %151 = vector.extract_strided_slice %137 {offsets = [0, 88], sizes = [16, 8], strides = [1, 1]} : vector<16x128xf32> to vector<16x8xf32>
    %152 = tpu.concatenate %148, %149, %150, %151 in 0 : vector<16x8xf32>, vector<16x8xf32>, vector<16x8xf32>, vector<16x8xf32> -> vector<64x8xf32>
    "tpu.trace_start"() <{level = 10 : i32, message = "qd,kd->qk"}> : () -> ()
    %cst_81 = arith.constant dense<0.000000e+00> : vector<64x64xf32>
    %153 = tpu.matmul %142, %147, %cst_81 {dimension_numbers = #tpu.dot_dimension_numbers<[1], [1], [0], [0], [0, 0, 1, 0], [], []>} : vector<64x8xf32>, vector<64x8xf32>, vector<64x64xf32> -> vector<64x64xf32>
    "tpu.trace_stop"() : () -> ()
    %154 = arith.addf %153, %3 : vector<64x64xf32>
    %cst_82 = arith.constant dense<0xFF800000> : vector<64xf32>
    %155 = vector.multi_reduction <maximumf>, %154, %cst_82 [1] : vector<64x64xf32> to vector<64xf32>
    %156 = vector.shape_cast %155 : vector<64xf32> to vector<64x1xf32>
    %157 = vector.broadcast %156 : vector<64x1xf32> to vector<64x64xf32>
    %158 = arith.subf %154, %157 : vector<64x64xf32>
    %159 = math.exp %158 : vector<64x64xf32>
    %cst_83 = arith.constant dense<0.000000e+00> : vector<64xf32>
    %160 = vector.multi_reduction <add>, %159, %cst_83 [1] : vector<64x64xf32> to vector<64xf32>
    %161 = vector.shape_cast %160 : vector<64xf32> to vector<64x1xf32>
    %162 = tpu.reciprocal %161 {approx = true} : vector<64x1xf32> -> vector<64x1xf32>
    %163 = vector.broadcast %162 : vector<64x1xf32> to vector<64x64xf32>
    %164 = arith.mulf %159, %163 : vector<64x64xf32>
    %cst_84 = arith.constant dense<0.000000e+00> : vector<64x8xf32>
    %165 = tpu.matmul %164, %152, %cst_84 {dimension_numbers = #tpu.dot_dimension_numbers<[1], [0], [0], [1], [0, 0, 1, 1], [], []>} : vector<64x64xf32>, vector<64x8xf32>, vector<64x8xf32> -> vector<64x8xf32>
    %166 = vector.shape_cast %165 : vector<64x8xf32> to vector<4x16x8xf32>
    %c1_i32_85 = arith.constant 1 : i32
    %c0_i32_86 = arith.constant 0 : i32
    %c0_i32_87 = arith.constant 0 : i32
    %167 = tpu.memref_slice %arg1[%c1_i32_85, %c0_i32_86, %c0_i32_87] : memref<2x232x128xf32, #tpu.memory_space<vmem>> -> memref<1x232x128xf32, #tpu.memory_space<vmem>>
    %168 = tpu.memref_squeeze %167 : memref<1x232x128xf32, #tpu.memory_space<vmem>> -> memref<232x128xf32, #tpu.memory_space<vmem>>
    %c32_88 = arith.constant 32 : index
    %c0_89 = arith.constant 0 : index
    %169 = vector.load %168[%c32_88, %c0_89] : memref<232x128xf32, #tpu.memory_space<vmem>>, vector<32x128xf32>
    %170 = vector.shape_cast %169 : vector<32x128xf32> to vector<4x8x128xf32>
    "tpu.trace_start"() <{level = 10 : i32, message = "hbd,hdo->hbo"}> : () -> ()
    %cst_90 = arith.constant dense<0.000000e+00> : vector<4x16x128xf32>
    %171 = tpu.matmul %166, %170, %cst_90 {dimension_numbers = #tpu.dot_dimension_numbers<[2], [1], [1], [2], [0, 0, 0, 1, 1, 2], [0], [0]>} : vector<4x16x8xf32>, vector<4x8x128xf32>, vector<4x16x128xf32> -> vector<4x16x128xf32>
    "tpu.trace_stop"() : () -> ()
    %cst_91 = arith.constant dense<0.000000e+00> : vector<16x128xf32>
    %172 = vector.multi_reduction <add>, %171, %cst_91 [0] : vector<4x16x128xf32> to vector<16x128xf32>
    %c1_i32_92 = arith.constant 1 : i32
    %c0_i32_93 = arith.constant 0 : i32
    %c0_i32_94 = arith.constant 0 : i32
    %173 = tpu.memref_slice %arg1[%c1_i32_92, %c0_i32_93, %c0_i32_94] : memref<2x232x128xf32, #tpu.memory_space<vmem>> -> memref<1x232x128xf32, #tpu.memory_space<vmem>>
    %174 = tpu.memref_squeeze %173 : memref<1x232x128xf32, #tpu.memory_space<vmem>> -> memref<232x128xf32, #tpu.memory_space<vmem>>
    %c225_95 = arith.constant 225 : index
    %c0_96 = arith.constant 0 : index
    %175 = vector.load %174[%c225_95, %c0_96] : memref<232x128xf32, #tpu.memory_space<vmem>>, vector<1x128xf32>
    %176 = vector.broadcast %175 : vector<1x128xf32> to vector<16x128xf32>
    %177 = arith.addf %172, %176 : vector<16x128xf32>
    %178 = vector.extract_strided_slice %177 {offsets = [0, 0], sizes = [16, 32], strides = [1, 1]} : vector<16x128xf32> to vector<16x32xf32>
    %179 = arith.addf %128, %178 : vector<16x32xf32>
    %c1_i32_97 = arith.constant 1 : i32
    %c0_i32_98 = arith.constant 0 : i32
    %c0_i32_99 = arith.constant 0 : i32
    %180 = tpu.memref_slice %arg1[%c1_i32_97, %c0_i32_98, %c0_i32_99] : memref<2x232x128xf32, #tpu.memory_space<vmem>> -> memref<1x232x128xf32, #tpu.memory_space<vmem>>
    %181 = tpu.memref_squeeze %180 : memref<1x232x128xf32, #tpu.memory_space<vmem>> -> memref<232x128xf32, #tpu.memory_space<vmem>>
    %c228_100 = arith.constant 228 : index
    %c0_101 = arith.constant 0 : index
    %182 = vector.load %181[%c228_100, %c0_101] : memref<232x128xf32, #tpu.memory_space<vmem>>, vector<1x32xf32>
    %c1_i32_102 = arith.constant 1 : i32
    %c0_i32_103 = arith.constant 0 : i32
    %c0_i32_104 = arith.constant 0 : i32
    %183 = tpu.memref_slice %arg1[%c1_i32_102, %c0_i32_103, %c0_i32_104] : memref<2x232x128xf32, #tpu.memory_space<vmem>> -> memref<1x232x128xf32, #tpu.memory_space<vmem>>
    %184 = tpu.memref_squeeze %183 : memref<1x232x128xf32, #tpu.memory_space<vmem>> -> memref<232x128xf32, #tpu.memory_space<vmem>>
    %c229_105 = arith.constant 229 : index
    %c0_106 = arith.constant 0 : index
    %185 = vector.load %184[%c229_105, %c0_106] : memref<232x128xf32, #tpu.memory_space<vmem>>, vector<1x32xf32>
    %cst_107 = arith.constant dense<0.000000e+00> : vector<16xf32>
    %186 = vector.multi_reduction <add>, %179, %cst_107 [1] : vector<16x32xf32> to vector<16xf32>
    %187 = vector.shape_cast %186 : vector<16xf32> to vector<16x1xf32>
    %cst_108 = arith.constant 3.125000e-02 : f32
    %188 = vector.broadcast %cst_108 : f32 to vector<16x1xf32>
    %189 = arith.mulf %187, %188 : vector<16x1xf32>
    %190 = vector.broadcast %189 : vector<16x1xf32> to vector<16x32xf32>
    %191 = arith.subf %179, %190 : vector<16x32xf32>
    %192 = arith.mulf %191, %191 : vector<16x32xf32>
    %cst_109 = arith.constant dense<0.000000e+00> : vector<16xf32>
    %193 = vector.multi_reduction <add>, %192, %cst_109 [1] : vector<16x32xf32> to vector<16xf32>
    %194 = vector.shape_cast %193 : vector<16xf32> to vector<16x1xf32>
    %cst_110 = arith.constant 3.125000e-02 : f32
    %195 = vector.broadcast %cst_110 : f32 to vector<16x1xf32>
    %196 = arith.mulf %194, %195 : vector<16x1xf32>
    %cst_111 = arith.constant 9.99999974E-6 : f32
    %197 = vector.broadcast %cst_111 : f32 to vector<16x1xf32>
    %198 = arith.addf %196, %197 : vector<16x1xf32>
    %199 = math.rsqrt %198 : vector<16x1xf32>
    %200 = vector.broadcast %199 : vector<16x1xf32> to vector<16x32xf32>
    %201 = arith.mulf %191, %200 : vector<16x32xf32>
    %202 = vector.broadcast %182 : vector<1x32xf32> to vector<16x32xf32>
    %203 = arith.mulf %201, %202 : vector<16x32xf32>
    %204 = vector.broadcast %185 : vector<1x32xf32> to vector<16x32xf32>
    %205 = arith.addf %203, %204 : vector<16x32xf32>
    %c1_i32_112 = arith.constant 1 : i32
    %c0_i32_113 = arith.constant 0 : i32
    %c0_i32_114 = arith.constant 0 : i32
    %206 = tpu.memref_slice %arg1[%c1_i32_112, %c0_i32_113, %c0_i32_114] : memref<2x232x128xf32, #tpu.memory_space<vmem>> -> memref<1x232x128xf32, #tpu.memory_space<vmem>>
    %207 = tpu.memref_squeeze %206 : memref<1x232x128xf32, #tpu.memory_space<vmem>> -> memref<232x128xf32, #tpu.memory_space<vmem>>
    %c64_115 = arith.constant 64 : index
    %c0_116 = arith.constant 0 : index
    %208 = vector.load %207[%c64_115, %c0_116] : memref<232x128xf32, #tpu.memory_space<vmem>>, vector<32x128xf32>
    %cst_117 = arith.constant dense<0.000000e+00> : vector<16x128xf32>
    %209 = tpu.matmul %205, %208, %cst_117 {dimension_numbers = #tpu.dot_dimension_numbers<[1], [0], [0], [1], [0, 0, 1, 1], [], []>} : vector<16x32xf32>, vector<32x128xf32>, vector<16x128xf32> -> vector<16x128xf32>
    %c1_i32_118 = arith.constant 1 : i32
    %c0_i32_119 = arith.constant 0 : i32
    %c0_i32_120 = arith.constant 0 : i32
    %210 = tpu.memref_slice %arg1[%c1_i32_118, %c0_i32_119, %c0_i32_120] : memref<2x232x128xf32, #tpu.memory_space<vmem>> -> memref<1x232x128xf32, #tpu.memory_space<vmem>>
    %211 = tpu.memref_squeeze %210 : memref<1x232x128xf32, #tpu.memory_space<vmem>> -> memref<232x128xf32, #tpu.memory_space<vmem>>
    %c226_121 = arith.constant 226 : index
    %c0_122 = arith.constant 0 : index
    %212 = vector.load %211[%c226_121, %c0_122] : memref<232x128xf32, #tpu.memory_space<vmem>>, vector<1x128xf32>
    %213 = vector.broadcast %212 : vector<1x128xf32> to vector<16x128xf32>
    %214 = arith.addf %209, %213 : vector<16x128xf32>
    %cst_123 = arith.constant 0.000000e+00 : f32
    %215 = vector.broadcast %cst_123 : f32 to vector<16x128xf32>
    %216 = arith.maximumf %214, %215 : vector<16x128xf32>
    %c1_i32_124 = arith.constant 1 : i32
    %c0_i32_125 = arith.constant 0 : i32
    %c0_i32_126 = arith.constant 0 : i32
    %217 = tpu.memref_slice %arg1[%c1_i32_124, %c0_i32_125, %c0_i32_126] : memref<2x232x128xf32, #tpu.memory_space<vmem>> -> memref<1x232x128xf32, #tpu.memory_space<vmem>>
    %218 = tpu.memref_squeeze %217 : memref<1x232x128xf32, #tpu.memory_space<vmem>> -> memref<232x128xf32, #tpu.memory_space<vmem>>
    %c96_127 = arith.constant 96 : index
    %c0_128 = arith.constant 0 : index
    %219 = vector.load %218[%c96_127, %c0_128] : memref<232x128xf32, #tpu.memory_space<vmem>>, vector<128x128xf32>
    %cst_129 = arith.constant dense<0.000000e+00> : vector<16x128xf32>
    %220 = tpu.matmul %216, %219, %cst_129 {dimension_numbers = #tpu.dot_dimension_numbers<[1], [0], [0], [1], [0, 0, 1, 1], [], []>} : vector<16x128xf32>, vector<128x128xf32>, vector<16x128xf32> -> vector<16x128xf32>
    %c1_i32_130 = arith.constant 1 : i32
    %c0_i32_131 = arith.constant 0 : i32
    %c0_i32_132 = arith.constant 0 : i32
    %221 = tpu.memref_slice %arg1[%c1_i32_130, %c0_i32_131, %c0_i32_132] : memref<2x232x128xf32, #tpu.memory_space<vmem>> -> memref<1x232x128xf32, #tpu.memory_space<vmem>>
    %222 = tpu.memref_squeeze %221 : memref<1x232x128xf32, #tpu.memory_space<vmem>> -> memref<232x128xf32, #tpu.memory_space<vmem>>
    %c227_133 = arith.constant 227 : index
    %c0_134 = arith.constant 0 : index
    %223 = vector.load %222[%c227_133, %c0_134] : memref<232x128xf32, #tpu.memory_space<vmem>>, vector<1x128xf32>
    %224 = vector.broadcast %223 : vector<1x128xf32> to vector<16x128xf32>
    %225 = arith.addf %220, %224 : vector<16x128xf32>
    %226 = vector.extract_strided_slice %225 {offsets = [0, 0], sizes = [16, 32], strides = [1, 1]} : vector<16x128xf32> to vector<16x32xf32>
    %227 = arith.addf %205, %226 : vector<16x32xf32>
    %c1_i32_135 = arith.constant 1 : i32
    %c0_i32_136 = arith.constant 0 : i32
    %c0_i32_137 = arith.constant 0 : i32
    %228 = tpu.memref_slice %arg1[%c1_i32_135, %c0_i32_136, %c0_i32_137] : memref<2x232x128xf32, #tpu.memory_space<vmem>> -> memref<1x232x128xf32, #tpu.memory_space<vmem>>
    %229 = tpu.memref_squeeze %228 : memref<1x232x128xf32, #tpu.memory_space<vmem>> -> memref<232x128xf32, #tpu.memory_space<vmem>>
    %c230_138 = arith.constant 230 : index
    %c0_139 = arith.constant 0 : index
    %230 = vector.load %229[%c230_138, %c0_139] : memref<232x128xf32, #tpu.memory_space<vmem>>, vector<1x32xf32>
    %c1_i32_140 = arith.constant 1 : i32
    %c0_i32_141 = arith.constant 0 : i32
    %c0_i32_142 = arith.constant 0 : i32
    %231 = tpu.memref_slice %arg1[%c1_i32_140, %c0_i32_141, %c0_i32_142] : memref<2x232x128xf32, #tpu.memory_space<vmem>> -> memref<1x232x128xf32, #tpu.memory_space<vmem>>
    %232 = tpu.memref_squeeze %231 : memref<1x232x128xf32, #tpu.memory_space<vmem>> -> memref<232x128xf32, #tpu.memory_space<vmem>>
    %c231_143 = arith.constant 231 : index
    %c0_144 = arith.constant 0 : index
    %233 = vector.load %232[%c231_143, %c0_144] : memref<232x128xf32, #tpu.memory_space<vmem>>, vector<1x32xf32>
    %cst_145 = arith.constant dense<0.000000e+00> : vector<16xf32>
    %234 = vector.multi_reduction <add>, %227, %cst_145 [1] : vector<16x32xf32> to vector<16xf32>
    %235 = vector.shape_cast %234 : vector<16xf32> to vector<16x1xf32>
    %cst_146 = arith.constant 3.125000e-02 : f32
    %236 = vector.broadcast %cst_146 : f32 to vector<16x1xf32>
    %237 = arith.mulf %235, %236 : vector<16x1xf32>
    %238 = vector.broadcast %237 : vector<16x1xf32> to vector<16x32xf32>
    %239 = arith.subf %227, %238 : vector<16x32xf32>
    %240 = arith.mulf %239, %239 : vector<16x32xf32>
    %cst_147 = arith.constant dense<0.000000e+00> : vector<16xf32>
    %241 = vector.multi_reduction <add>, %240, %cst_147 [1] : vector<16x32xf32> to vector<16xf32>
    %242 = vector.shape_cast %241 : vector<16xf32> to vector<16x1xf32>
    %cst_148 = arith.constant 3.125000e-02 : f32
    %243 = vector.broadcast %cst_148 : f32 to vector<16x1xf32>
    %244 = arith.mulf %242, %243 : vector<16x1xf32>
    %cst_149 = arith.constant 9.99999974E-6 : f32
    %245 = vector.broadcast %cst_149 : f32 to vector<16x1xf32>
    %246 = arith.addf %244, %245 : vector<16x1xf32>
    %247 = math.rsqrt %246 : vector<16x1xf32>
    %248 = vector.broadcast %247 : vector<16x1xf32> to vector<16x32xf32>
    %249 = arith.mulf %239, %248 : vector<16x32xf32>
    %250 = vector.broadcast %230 : vector<1x32xf32> to vector<16x32xf32>
    %251 = arith.mulf %249, %250 : vector<16x32xf32>
    %252 = vector.broadcast %233 : vector<1x32xf32> to vector<16x32xf32>
    %253 = arith.addf %251, %252 : vector<16x32xf32>
    %254 = vector.shape_cast %253 : vector<16x32xf32> to vector<2x8x32xf32>
    %cst_150 = arith.constant dense<0.000000e+00> : vector<2x32xf32>
    %255 = vector.multi_reduction <add>, %254, %cst_150 [1] : vector<2x8x32xf32> to vector<2x32xf32>
    %cst_151 = arith.constant 1.250000e-01 : f32
    %256 = vector.broadcast %cst_151 : f32 to vector<2x32xf32>
    %257 = arith.mulf %255, %256 : vector<2x32xf32>
    %c80 = arith.constant 80 : index
    %c0_152 = arith.constant 0 : index
    %258 = vector.load %arg2[%c80, %c0_152] : memref<120x128xf32, #tpu.memory_space<vmem>>, vector<32x128xf32>
    %cst_153 = arith.constant dense<0.000000e+00> : vector<2x128xf32>
    %259 = tpu.matmul %257, %258, %cst_153 {dimension_numbers = #tpu.dot_dimension_numbers<[1], [0], [0], [1], [0, 0, 1, 1], [], []>} : vector<2x32xf32>, vector<32x128xf32>, vector<2x128xf32> -> vector<2x128xf32>
    %c112 = arith.constant 112 : index
    %c0_154 = arith.constant 0 : index
    %260 = vector.load %arg2[%c112, %c0_154] : memref<120x128xf32, #tpu.memory_space<vmem>>, vector<1x128xf32>
    %261 = vector.broadcast %260 : vector<1x128xf32> to vector<2x128xf32>
    %262 = arith.addf %259, %261 : vector<2x128xf32>
    %c0_155 = arith.constant 0 : index
    %c0_156 = arith.constant 0 : index
    %263 = vector.load %arg3[%c0_155, %c0_156] : memref<2x128xf32, #tpu.memory_space<vmem>>, vector<2x128xf32>
    tpu.vector_store %arg3[%c0_155, %c0_156], %262 {strides = array<i32>} : memref<2x128xf32, #tpu.memory_space<vmem>>, vector<2x128xf32>,
    return
  }
}

</mosaic_0001>

<llo_original>
// kernel: tpu_custom_call.1
$region0: #{tpu_custom_call.1}
  #allocation0 [shape = 'u32[]', space=smem, size = 0x4, offset = 0x4, fixed_abs, tag = 'smem constant byte address 0x4 - core index']
  #allocation1 [shape = 'u32[144,128]{1,0:T(1,128)}', space=vmem, size = 0x12000, scoped, tag = 'internal scratch']
  %s0 = inlined_call_operand.hbm [shape: f32[16,32], index: 0, kind: input, shape index: {}]
  %s1 = inlined_call_operand.hbm [shape: f32[2,232,128], index: 1, kind: input, shape index: {}]
  %s2 = inlined_call_operand.hbm [shape: f32[120,128], index: 2, kind: input, shape index: {}]
  %s3 = inlined_call_operand.hbm [shape: f32[2,128], index: 3, kind: output, shape index: {}]
  %s4 = sld [smem:[#allocation0]]
  $region34: #{tpu_custom_call.1} parent=0
    _
  %s6 = ssub.s32 1, %s4
  %s7 = scalar_select 0, %s6, %s4
  $region1: #{tpu_custom_call.1} parent=0
    #allocation2 [shape = 'u8[8192]{0}', space=vmem, size = 0x2000, scoped, tag = 'input window, operand 0, single buffered']
    #allocation3 [shape = 's32[1]{0}', space=sflag, size = 0x4, scoped, tag = 'scoped memory for tpu_custom_call.1']
    #allocation4 [shape = 's32[1]{0}', space=sflag, size = 0x4, scoped, tag = 'scoped memory for tpu_custom_call.1']
    #allocation5 [shape = 'u8[237568]{0}', space=vmem, size = 0x3a000, scoped, tag = 'input window, operand 1, single buffered']
    #allocation6 [shape = 's32[1]{0}', space=sflag, size = 0x4, scoped, tag = 'scoped memory for tpu_custom_call.1']
    #allocation7 [shape = 'u8[61440]{0}', space=vmem, size = 0xf000, scoped, tag = 'input window, operand 2, single buffered']
    #allocation8 [shape = 'u8[1024]{0}', space=vmem, size = 0x400, scoped, tag = 'output window, operand 0, single buffered']
    %8 = vsyncpa [#allocation3], 0
    %9 = vsyncpa [#allocation6], 0
    %10 = vsyncpa [#allocation4], 0
    // Predicated region
    $region2: #{tpu_custom_call.1} parent=1 // pred_check
      _
    $region3: #{tpu_custom_call.1} parent=1 // pred_check_branch
      %12 = sbr.rel (0) target = $region5
    $region4: #{tpu_custom_call.1} parent=1 // pred_region
      %s14 = ssub.s32 256, 256
      %15 = vsyncadd [#allocation3], %s14
      %s16 = sshll.u32 [#allocation2], 4
      %s17 = int_to_ptr.vmem [resolvable:$true] %s16
      %22 = dma.hbm_to_vmem [thread:$0]  %s0, 256, %s17, [#allocation3], 128, 128, 8
    $region5: #{tpu_custom_call.1} parent=1 // pred_fallthru
      _
    // Predicated region
    $region6: #{tpu_custom_call.1} parent=1 // pred_check
      _
    $region7: #{tpu_custom_call.1} parent=1 // pred_check_branch
      %24 = sbr.rel (0) target = $region9
    $region8: #{tpu_custom_call.1} parent=1 // pred_region
      %s26 = ssub.s32 7424, 7424
      %27 = vsyncadd [#allocation6], %s26
      %s28 = sshll.u32 [#allocation5], 4
      %s29 = int_to_ptr.vmem [resolvable:$true] %s28
      %34 = dma.hbm_to_vmem [thread:$0]  %s1, 7424, %s29, [#allocation6], 128, 128, 8
    $region9: #{tpu_custom_call.1} parent=1 // pred_fallthru
      _
    // Predicated region
    $region10: #{tpu_custom_call.1} parent=1 // pred_check
      _
    $region11: #{tpu_custom_call.1} parent=1 // pred_check_branch
      %36 = sbr.rel (0) target = $region13
    $region12: #{tpu_custom_call.1} parent=1 // pred_region
      %s38 = ssub.s32 1920, 1920
      %39 = vsyncadd [#allocation6], %s38
      %s40 = sshll.u32 [#allocation7], 4
      %s41 = int_to_ptr.vmem [resolvable:$true] %s40
      %46 = dma.hbm_to_vmem [thread:$0]  %s2, 1920, %s41, [#allocation6], 128, 128, 8
    $region13: #{tpu_custom_call.1} parent=1 // pred_fallthru
      _
    // Predicated region
    $region14: #{tpu_custom_call.1} parent=1 // pred_check
      _
    $region15: #{tpu_custom_call.1} parent=1 // pred_check_branch
      %48 = sbr.rel (0) target = $region17
    $region16: #{tpu_custom_call.1} parent=1 // pred_region
      %49 = dma.done [#allocation3], 256
    $region17: #{tpu_custom_call.1} parent=1 // pred_fallthru
      _
    // Predicated region
    $region18: #{tpu_custom_call.1} parent=1 // pred_check
      _
    $region19: #{tpu_custom_call.1} parent=1 // pred_check_branch
      %51 = sbr.rel (0) target = $region21
    $region20: #{tpu_custom_call.1} parent=1 // pred_region
      %52 = dma.done [#allocation6], 7424
    $region21: #{tpu_custom_call.1} parent=1 // pred_fallthru
      _
    // Predicated region
    $region22: #{tpu_custom_call.1} parent=1 // pred_check
      _
    $region23: #{tpu_custom_call.1} parent=1 // pred_check_branch
      %54 = sbr.rel (0) target = $region25
    $region24: #{tpu_custom_call.1} parent=1 // pred_region
      %55 = dma.done [#allocation6], 1920
    $region25: #{tpu_custom_call.1} parent=1 // pred_fallthru
      _
    %v56 = vld [vmem:[#allocation2] sm:$0xff]
    %v57 = vld [vmem:[#allocation2 + $0x8] sm:$0xff]
    %v58 = vld [vmem:[#allocation7] sm:$0xff]
    %v59 = vld [vmem:[#allocation7 + $0x8] sm:$0xff]
    %v60 = vadd.f32 %v56, %v58
    %v61 = vadd.f32 %v57, %v59
    %v62 = vld [vmem:[#allocation7 + $0x10] sm:$0xff]
    %v63 = vld [vmem:[#allocation7 + $0x18] sm:$0xff]
    %v64 = vld [vmem:[#allocation7 + $0x20] sm:$0xff]
    %v65 = vld [vmem:[#allocation7 + $0x28] sm:$0xff]
    %v66 = vld [vmem:[#allocation7 + $0x30] sm:$0xff]
    %v67 = vld [vmem:[#allocation7 + $0x38] sm:$0xff]
    %v68 = vld [vmem:[#allocation7 + $0x40] sm:$0xff]
    %v69 = vld [vmem:[#allocation7 + $0x48] sm:$0xff]
    %v70 = vld [vmem:[#allocation5] sm:$0xff]
    %v71 = vld [vmem:[#allocation5 + $0x8] sm:$0xff]
    %v72 = vld [vmem:[#allocation5 + $0x10] sm:$0xff]
    %v73 = vld [vmem:[#allocation5 + $0x18] sm:$0xff]
    %v74 = vld [vmem:[#allocation5 + $0xe0] sm:$0x1]
    %v75 = vlaneseq
    %v76 = vshrl.u32 %v75, 7
    %v77 = vsub.s32 0, %v76
    %v78 = vrot.slane %v74, %v77
    %vm79 = vcmask 261120
    %v81 = vsel %vm79, %v60, 0
    %v84 = vsel %vm79, %v61, 0
    %86 = vmatprep.subr.mxu0 0.0
    %87 = vmatpush1.msra.mxu0 0.0
    %88 = vmatprep.subr.mxu0 0.0
    %89 = vmatpush1.msra.mxu0 0.0
    %90 = vmatprep.subr.mxu0 0.0
    %91 = vmatpush1.msra.mxu0 0.0
    %92 = vmatprep.subr.mxu0 0.0
    %93 = vmatpush1.msra.mxu0 0.0
    %94 = vmatprep.subr.mxu0 0.0
    %95 = vmatpush1.msra.mxu0 0.0
    %96 = vmatprep.subr.mxu0 0.0
    %97 = vmatpush1.msra.mxu0 0.0
    %98 = vmatprep.subr.mxu0 0.0
    %99 = vmatpush1.msra.mxu0 0.0
    %100 = vmatprep.subr.mxu0 0.0
    %101 = vmatpush1.msra.mxu0 0.0
    %102 = vmatprep.subr.mxu0 0.0
    %103 = vmatpush1.msra.mxu0 0.0
    %104 = vmatprep.subr.mxu0 0.0
    %105 = vmatpush1.msra.mxu0 0.0
    %106 = vmatprep.subr.mxu0 0.0
    %107 = vmatpush1.msra.mxu0 0.0
    %108 = vmatprep.subr.mxu0 0.0
    %109 = vmatpush1.msra.mxu0 0.0
    %110 = vmatprep.subr.mxu0 0.0
    %111 = vmatpush1.msra.mxu0 %v73
    %112 = vmatprep.subr.mxu0 0.0
    %113 = vmatpush1.msra.mxu0 %v72
    %114 = vmatprep.subr.mxu0 0.0
    %115 = vmatpush1.msra.mxu0 %v71
    %116 = vmatprep.subr.mxu0 0.0
    %117 = vmatpush1.msra.mxu0 %v70
    %118 = vmatprep.subr.mxu0 0.0
    %119 = vmatpush2.msra.mxu0 0.0
    %120 = vmatprep.subr.mxu0 0.0
    %121 = vmatpush2.msra.mxu0 0.0
    %122 = vmatprep.subr.mxu0 0.0
    %123 = vmatpush2.msra.mxu0 0.0
    %124 = vmatprep.subr.mxu0 0.0
    %125 = vmatpush2.msra.mxu0 0.0
    %126 = vmatprep.subr.mxu0 0.0
    %127 = vmatpush2.msra.mxu0 0.0
    %128 = vmatprep.subr.mxu0 0.0
    %129 = vmatpush2.msra.mxu0 0.0
    %130 = vmatprep.subr.mxu0 0.0
    %131 = vmatpush2.msra.mxu0 0.0
    %132 = vmatprep.subr.mxu0 0.0
    %133 = vmatpush2.msra.mxu0 0.0
    %134 = vmatprep.subr.mxu0 0.0
    %135 = vmatpush2.msra.mxu0 0.0
    %136 = vmatprep.subr.mxu0 0.0
    %137 = vmatpush2.msra.mxu0 0.0
    %138 = vmatprep.subr.mxu0 0.0
    %139 = vmatpush2.msra.mxu0 0.0
    %140 = vmatprep.subr.mxu0 0.0
    %141 = vmatpush2.msra.mxu0 0.0
    %142 = vmatprep.subr.mxu0 0.0
    %143 = vmatpush2.msra.mxu0 0.0
    %144 = vmatprep.subr.mxu0 0.0
    %145 = vmatpush2.msra.mxu0 0.0
    %146 = vmatprep.subr.mxu0 0.0
    %147 = vmatpush2.msra.mxu0 0.0
    %148 = vmatprep.subr.mxu0 0.0
    %149 = vmatpush2.msra.mxu0 0.0
    %150 = vmatprep.mubr.f32.mxu0 0.0
    %151 = vmatmul.mubr.f32.gmra.mxu0 %v81
    %v152 = vpop.f32.mrf.mxu0
    %v153 = vadd.f32 %v78, %v152
    %v154 = vpop.f32.mrf.mxu0
    %155 = vmatprep.mubr.f32.mxu0 0.0
    %156 = vmatmul.mubr.f32.gmra.mxu0 %v84
    %v157 = vpop.f32.mrf.mxu0
    %v158 = vadd.f32 %v78, %v157
    %v159 = vpop.f32.mrf.mxu0
    %160 = vdwg.mxu0
    %163 = vrot.lane.b32.xlu0 %v153, 120
    %v164 = vpop.permute.xlu0 %163
    %165 = vrot.lane.b32.xlu0 %v158, 120
    %v166 = vpop.permute.xlu0 %165
    %167 = vrot.lane.b32.xlu0 %v153, 112
    %v168 = vpop.permute.xlu0 %167
    %169 = vrot.lane.b32.xlu0 %v158, 112
    %v170 = vpop.permute.xlu0 %169
    %171 = vrot.lane.b32.xlu0 %v153, 104
    %v172 = vpop.permute.xlu0 %171
    %173 = vrot.lane.b32.xlu0 %v158, 104
    %v174 = vpop.permute.xlu0 %173
    %175 = vrot.lane.b32.xlu0 %v153, 96
    %v176 = vpop.permute.xlu0 %175
    %177 = vrot.lane.b32.xlu0 %v158, 96
    %v178 = vpop.permute.xlu0 %177
    %179 = vrot.lane.b32.xlu0 %v164, 96
    %v180 = vpop.permute.xlu0 %179
    %181 = vrot.lane.b32.xlu0 %v166, 96
    %v182 = vpop.permute.xlu0 %181
    %183 = vrot.lane.b32.xlu0 %v168, 96
    %v184 = vpop.permute.xlu0 %183
    %185 = vrot.lane.b32.xlu0 %v170, 96
    %v186 = vpop.permute.xlu0 %185
    %187 = vrot.lane.b32.xlu0 %v172, 96
    %v188 = vpop.permute.xlu0 %187
    %189 = vrot.lane.b32.xlu0 %v174, 96
    %v190 = vpop.permute.xlu0 %189
    %vm191 = vcmask 64512
    %v192 = vsel %vm191, %v153, 0
    %v194 = vsel %vm191, %v158, 0
    %v196 = vsel %vm191, %v164, 0
    %v198 = vsel %vm191, %v166, 0
    %v200 = vsel %vm191, %v168, 0
    %v202 = vsel %vm191, %v170, 0
    %v204 = vsel %vm191, %v172, 0
    %v206 = vsel %vm191, %v174, 0
    %v208 = vsel %vm191, %v176, 0
    %v210 = vsel %vm191, %v178, 0
    %v212 = vsel %vm191, %v180, 0
    %v214 = vsel %vm191, %v182, 0
    %v216 = vsel %vm191, %v184, 0
    %v218 = vsel %vm191, %v186, 0
    %v220 = vsel %vm191, %v188, 0
    %v222 = vsel %vm191, %v190, 0
    %224 = vmatprep.subr.mxu0 0.0
    %225 = vmatpush1.xpose.msra.mxu0 0.0
    %226 = vmatprep.subr.mxu0 0.0
    %227 = vmatpush1.xpose.msra.mxu0 0.0
    %228 = vmatprep.subr.mxu0 0.0
    %229 = vmatpush1.xpose.msra.mxu0 0.0
    %230 = vmatprep.subr.mxu0 0.0
    %231 = vmatpush1.xpose.msra.mxu0 0.0
    %232 = vmatprep.subr.mxu0 0.0
    %233 = vmatpush1.xpose.msra.mxu0 0.0
    %234 = vmatprep.subr.mxu0 0.0
    %235 = vmatpush1.xpose.msra.mxu0 0.0
    %236 = vmatprep.subr.mxu0 0.0
    %237 = vmatpush1.xpose.msra.mxu0 0.0
    %238 = vmatprep.subr.mxu0 0.0
    %239 = vmatpush1.xpose.msra.mxu0 0.0
    %240 = vmatprep.subr.mxu0 0.0
    %241 = vmatpush1.xpose.msra.mxu0 %v222
    %242 = vmatprep.subr.mxu0 0.0
    %243 = vmatpush1.xpose.msra.mxu0 %v220
    %244 = vmatprep.subr.mxu0 0.0
    %245 = vmatpush1.xpose.msra.mxu0 %v218
    %246 = vmatprep.subr.mxu0 0.0
    %247 = vmatpush1.xpose.msra.mxu0 %v216
    %248 = vmatprep.subr.mxu0 0.0
    %249 = vmatpush1.xpose.msra.mxu0 %v214
    %250 = vmatprep.subr.mxu0 0.0
    %251 = vmatpush1.xpose.msra.mxu0 %v212
    %252 = vmatprep.subr.mxu0 0.0
    %253 = vmatpush1.xpose.msra.mxu0 %v210
    %254 = vmatprep.subr.mxu0 0.0
    %255 = vmatpush1.xpose.msra.mxu0 %v208
    %256 = vmatprep.subr.mxu0 0.0
    %257 = vmatpush2.xpose.msra.mxu0 0.0
    %258 = vmatprep.subr.mxu0 0.0
    %259 = vmatpush2.xpose.msra.mxu0 0.0
    %260 = vmatprep.subr.mxu0 0.0
    %261 = vmatpush2.xpose.msra.mxu0 0.0
    %262 = vmatprep.subr.mxu0 0.0
    %263 = vmatpush2.xpose.msra.mxu0 0.0
    %264 = vmatprep.subr.mxu0 0.0
    %265 = vmatpush2.xpose.msra.mxu0 0.0
    %266 = vmatprep.subr.mxu0 0.0
    %267 = vmatpush2.xpose.msra.mxu0 0.0
    %268 = vmatprep.subr.mxu0 0.0
    %269 = vmatpush2.xpose.msra.mxu0 0.0
    %270 = vmatprep.subr.mxu0 0.0
    %271 = vmatpush2.xpose.msra.mxu0 0.0
    %272 = vmatprep.subr.mxu0 0.0
    %273 = vmatpush2.xpose.msra.mxu0 0.0
    %274 = vmatprep.subr.mxu0 0.0
    %275 = vmatpush2.xpose.msra.mxu0 0.0
    %276 = vmatprep.subr.mxu0 0.0
    %277 = vmatpush2.xpose.msra.mxu0 0.0
    %278 = vmatprep.subr.mxu0 0.0
    %279 = vmatpush2.xpose.msra.mxu0 0.0
    %280 = vmatprep.subr.mxu0 0.0
    %281 = vmatpush2.xpose.msra.mxu0 0.0
    %282 = vmatprep.subr.mxu0 0.0
    %283 = vmatpush2.xpose.msra.mxu0 0.0
    %284 = vmatprep.subr.mxu0 0.0
    %285 = vmatpush2.xpose.msra.mxu0 0.0
    %286 = vmatprep.subr.mxu0 0.0
    %287 = vmatpush2.xpose.msra.mxu0 0.0
    %288 = vmatprep.mubr.f32.mxu0 0.0
    %289 = vmatmul.mubr.f32.gmra.mxu0 %v192
    %v290 = vpop.f32.mrf.mxu0
    %v291 = vadd.f32 %v62, %v290
    %v292 = vpop.f32.mrf.mxu0
    %293 = vmatprep.mubr.f32.mxu0 0.0
    %294 = vmatmul.mubr.f32.gmra.mxu0 %v194
    %v295 = vpop.f32.mrf.mxu0
    %v296 = vadd.f32 %v63, %v295
    %v297 = vpop.f32.mrf.mxu0
    %298 = vmatprep.mubr.f32.mxu0 0.0
    %299 = vmatmul.mubr.f32.gmra.mxu0 %v196
    %v300 = vpop.f32.mrf.mxu0
    %v301 = vadd.f32 %v64, %v300
    %v302 = vpop.f32.mrf.mxu0
    %303 = vmatprep.mubr.f32.mxu0 0.0
    %304 = vmatmul.mubr.f32.gmra.mxu0 %v198
    %v305 = vpop.f32.mrf.mxu0
    %v306 = vadd.f32 %v65, %v305
    %v307 = vpop.f32.mrf.mxu0
    %308 = vmatprep.mubr.f32.mxu0 0.0
    %309 = vmatmul.mubr.f32.gmra.mxu0 %v200
    %v310 = vpop.f32.mrf.mxu0
    %v311 = vadd.f32 %v66, %v310
    %v312 = vpop.f32.mrf.mxu0
    %313 = vmatprep.mubr.f32.mxu0 0.0
    %314 = vmatmul.mubr.f32.gmra.mxu0 %v202
    %v315 = vpop.f32.mrf.mxu0
    %v316 = vadd.f32 %v67, %v315
    %v317 = vpop.f32.mrf.mxu0
    %318 = vmatprep.mubr.f32.mxu0 0.0
    %319 = vmatmul.mubr.f32.gmra.mxu0 %v204
    %v320 = vpop.f32.mrf.mxu0
    %v321 = vadd.f32 %v68, %v320
    %v322 = vpop.f32.mrf.mxu0
    %323 = vmatprep.mubr.f32.mxu0 0.0
    %324 = vmatmul.mubr.f32.gmra.mxu0 %v206
    %v325 = vpop.f32.mrf.mxu0
    %v326 = vadd.f32 %v69, %v325
    %v327 = vpop.f32.mrf.mxu0
    %328 = vdwg.mxu0
    %vm329 = vcmask 523264
    %v330 = vsel %vm329, %v291, -inf
    %331 = vmax.xlane.f32.xlu0 %v330
    %v332 = vpop.xlane.xlu0 %331
    %v333 = vsel %vm329, %v296, -inf
    %334 = vmax.xlane.f32.xlu0 %v333
    %v335 = vpop.xlane.xlu0 %334
    %v336 = vsel %vm329, %v301, -inf
    %337 = vmax.xlane.f32.xlu0 %v336
    %v338 = vpop.xlane.xlu0 %337
    %v339 = vsel %vm329, %v306, -inf
    %340 = vmax.xlane.f32.xlu0 %v339
    %v341 = vpop.xlane.xlu0 %340
    %v342 = vsel %vm329, %v311, -inf
    %343 = vmax.xlane.f32.xlu0 %v342
    %v344 = vpop.xlane.xlu0 %343
    %v345 = vsel %vm329, %v316, -inf
    %346 = vmax.xlane.f32.xlu0 %v345
    %v347 = vpop.xlane.xlu0 %346
    %v348 = vsel %vm329, %v321, -inf
    %349 = vmax.xlane.f32.xlu0 %v348
    %v350 = vpop.xlane.xlu0 %349
    %v351 = vsel %vm329, %v326, -inf
    %352 = vmax.xlane.f32.xlu0 %v351
    %v353 = vpop.xlane.xlu0 %352
    %v354 = vsub.f32 %v291, %v332
    %v355 = vsub.f32 %v296, %v335
    %v356 = vsub.f32 %v301, %v338
    %v357 = vsub.f32 %v306, %v341
    %v358 = vsub.f32 %v311, %v344
    %v359 = vsub.f32 %v316, %v347
    %v360 = vsub.f32 %v321, %v350
    %v361 = vsub.f32 %v326, %v353
    %v362 = vmul.f32 %v354, 1.442695
    %v363 = vpow.pop %v362
    %v364 = vmul.f32 %v355, 1.442695
    %v365 = vpow.pop %v364
    %v366 = vmul.f32 %v356, 1.442695
    %v367 = vpow.pop %v366
    %v368 = vmul.f32 %v357, 1.442695
    %v369 = vpow.pop %v368
    %v370 = vmul.f32 %v358, 1.442695
    %v371 = vpow.pop %v370
    %v372 = vmul.f32 %v359, 1.442695
    %v373 = vpow.pop %v372
    %v374 = vmul.f32 %v360, 1.442695
    %v375 = vpow.pop %v374
    %v376 = vmul.f32 %v361, 1.442695
    %v377 = vpow.pop %v376
    %v378 = vsel %vm329, %v363, 0.0
    %379 = vadd.xlane.f32.xlu0 %v378
    %v380 = vpop.xlane.xlu0 %379
    %v381 = vsel %vm329, %v365, 0.0
    %382 = vadd.xlane.f32.xlu0 %v381
    %v383 = vpop.xlane.xlu0 %382
    %v384 = vsel %vm329, %v367, 0.0
    %385 = vadd.xlane.f32.xlu0 %v384
    %v386 = vpop.xlane.xlu0 %385
    %v387 = vsel %vm329, %v369, 0.0
    %388 = vadd.xlane.f32.xlu0 %v387
    %v389 = vpop.xlane.xlu0 %388
    %v390 = vsel %vm329, %v371, 0.0
    %391 = vadd.xlane.f32.xlu0 %v390
    %v392 = vpop.xlane.xlu0 %391
    %v393 = vsel %vm329, %v373, 0.0
    %394 = vadd.xlane.f32.xlu0 %v393
    %v395 = vpop.xlane.xlu0 %394
    %v396 = vsel %vm329, %v375, 0.0
    %397 = vadd.xlane.f32.xlu0 %v396
    %v398 = vpop.xlane.xlu0 %397
    %v399 = vsel %vm329, %v377, 0.0
    %400 = vadd.xlane.f32.xlu0 %v399
    %v401 = vpop.xlane.xlu0 %400
    %v402 = vrcp.pop %v380
    %v403 = vrcp.pop %v383
    %v404 = vrcp.pop %v386
    %v405 = vrcp.pop %v389
    %v406 = vrcp.pop %v392
    %v407 = vrcp.pop %v395
    %v408 = vrcp.pop %v398
    %v409 = vrcp.pop %v401
    %v410 = vmul.f32 %v363, %v402
    %v411 = vmul.f32 %v365, %v403
    %v412 = vmul.f32 %v367, %v404
    %v413 = vmul.f32 %v369, %v405
    %v414 = vmul.f32 %v371, %v406
    %v415 = vmul.f32 %v373, %v407
    %v416 = vmul.f32 %v375, %v408
    %v417 = vmul.f32 %v377, %v409
    %418 = vrot.lane.b32.xlu0 %v153, 64
    %v419 = vpop.permute.xlu0 %418
    %420 = vrot.lane.b32.xlu0 %v158, 64
    %v421 = vpop.permute.xlu0 %420
    %422 = vrot.lane.b32.xlu0 %v164, 64
    %v423 = vpop.permute.xlu0 %422
    %424 = vrot.lane.b32.xlu0 %v166, 64
    %v425 = vpop.permute.xlu0 %424
    %426 = vrot.lane.b32.xlu0 %v168, 64
    %v427 = vpop.permute.xlu0 %426
    %428 = vrot.lane.b32.xlu0 %v170, 64
    %v429 = vpop.permute.xlu0 %428
    %430 = vrot.lane.b32.xlu0 %v172, 64
    %v431 = vpop.permute.xlu0 %430
    %432 = vrot.lane.b32.xlu0 %v174, 64
    %v433 = vpop.permute.xlu0 %432
    %v443 = vsel %vm329, %v410, 0
    %v446 = vsel %vm329, %v411, 0
    %v449 = vsel %vm329, %v412, 0
    %v452 = vsel %vm329, %v413, 0
    %v455 = vsel %vm329, %v414, 0
    %v458 = vsel %vm329, %v415, 0
    %v461 = vsel %vm329, %v416, 0
    %v464 = vsel %vm329, %v417, 0
    %466 = vmatprep.subr.mxu0 0.0
    %467 = vmatpush1.msra.mxu0 0.0
    %468 = vmatprep.subr.mxu0 0.0
    %469 = vmatpush1.msra.mxu0 0.0
    %470 = vmatprep.subr.mxu0 0.0
    %471 = vmatpush1.msra.mxu0 0.0
    %472 = vmatprep.subr.mxu0 0.0
    %473 = vmatpush1.msra.mxu0 0.0
    %474 = vmatprep.subr.mxu0 0.0
    %475 = vmatpush1.msra.mxu0 0.0
    %476 = vmatprep.subr.mxu0 0.0
    %477 = vmatpush1.msra.mxu0 0.0
    %478 = vmatprep.subr.mxu0 0.0
    %479 = vmatpush1.msra.mxu0 0.0
    %480 = vmatprep.subr.mxu0 0.0
    %481 = vmatpush1.msra.mxu0 0.0
    %482 = vmatprep.subr.mxu0 0.0
    %483 = vmatpush1.msra.mxu0 %v433
    %484 = vmatprep.subr.mxu0 0.0
    %485 = vmatpush1.msra.mxu0 %v431
    %486 = vmatprep.subr.mxu0 0.0
    %487 = vmatpush1.msra.mxu0 %v429
    %488 = vmatprep.subr.mxu0 0.0
    %489 = vmatpush1.msra.mxu0 %v427
    %490 = vmatprep.subr.mxu0 0.0
    %491 = vmatpush1.msra.mxu0 %v425
    %492 = vmatprep.subr.mxu0 0.0
    %493 = vmatpush1.msra.mxu0 %v423
    %494 = vmatprep.subr.mxu0 0.0
    %495 = vmatpush1.msra.mxu0 %v421
    %496 = vmatprep.subr.mxu0 0.0
    %497 = vmatpush1.msra.mxu0 %v419
    %498 = vmatprep.subr.mxu0 0.0
    %499 = vmatpush2.msra.mxu0 0.0
    %500 = vmatprep.subr.mxu0 0.0
    %501 = vmatpush2.msra.mxu0 0.0
    %502 = vmatprep.subr.mxu0 0.0
    %503 = vmatpush2.msra.mxu0 0.0
    %504 = vmatprep.subr.mxu0 0.0
    %505 = vmatpush2.msra.mxu0 0.0
    %506 = vmatprep.subr.mxu0 0.0
    %507 = vmatpush2.msra.mxu0 0.0
    %508 = vmatprep.subr.mxu0 0.0
    %509 = vmatpush2.msra.mxu0 0.0
    %510 = vmatprep.subr.mxu0 0.0
    %511 = vmatpush2.msra.mxu0 0.0
    %512 = vmatprep.subr.mxu0 0.0
    %513 = vmatpush2.msra.mxu0 0.0
    %514 = vmatprep.subr.mxu0 0.0
    %515 = vmatpush2.msra.mxu0 0.0
    %516 = vmatprep.subr.mxu0 0.0
    %517 = vmatpush2.msra.mxu0 0.0
    %518 = vmatprep.subr.mxu0 0.0
    %519 = vmatpush2.msra.mxu0 0.0
    %520 = vmatprep.subr.mxu0 0.0
    %521 = vmatpush2.msra.mxu0 0.0
    %522 = vmatprep.subr.mxu0 0.0
    %523 = vmatpush2.msra.mxu0 0.0
    %524 = vmatprep.subr.mxu0 0.0
    %525 = vmatpush2.msra.mxu0 0.0
    %526 = vmatprep.subr.mxu0 0.0
    %527 = vmatpush2.msra.mxu0 0.0
    %528 = vmatprep.subr.mxu0 0.0
    %529 = vmatpush2.msra.mxu0 0.0
    %530 = vmatprep.mubr.f32.mxu0 0.0
    %531 = vmatmul.mubr.f32.gmra.mxu0 %v443
    %v532 = vpop.f32.mrf.mxu0
    %v533 = vadd.f32 0.0, %v532
    %v534 = vpop.f32.mrf.mxu0
    %535 = vmatprep.mubr.f32.mxu0 0.0
    %536 = vmatmul.mubr.f32.gmra.mxu0 %v446
    %v537 = vpop.f32.mrf.mxu0
    %v538 = vadd.f32 0.0, %v537
    %v539 = vpop.f32.mrf.mxu0
    %540 = vmatprep.mubr.f32.mxu0 0.0
    %541 = vmatmul.mubr.f32.gmra.mxu0 %v449
    %v542 = vpop.f32.mrf.mxu0
    %v543 = vadd.f32 0.0, %v542
    %v544 = vpop.f32.mrf.mxu0
    %545 = vmatprep.mubr.f32.mxu0 0.0
    %546 = vmatmul.mubr.f32.gmra.mxu0 %v452
    %v547 = vpop.f32.mrf.mxu0
    %v548 = vadd.f32 0.0, %v547
    %v549 = vpop.f32.mrf.mxu0
    %550 = vmatprep.mubr.f32.mxu0 0.0
    %551 = vmatmul.mubr.f32.gmra.mxu0 %v455
    %v552 = vpop.f32.mrf.mxu0
    %v553 = vadd.f32 0.0, %v552
    %v554 = vpop.f32.mrf.mxu0
    %555 = vmatprep.mubr.f32.mxu0 0.0
    %556 = vmatmul.mubr.f32.gmra.mxu0 %v458
    %v557 = vpop.f32.mrf.mxu0
    %v558 = vadd.f32 0.0, %v557
    %v559 = vpop.f32.mrf.mxu0
    %560 = vmatprep.mubr.f32.mxu0 0.0
    %561 = vmatmul.mubr.f32.gmra.mxu0 %v461
    %v562 = vpop.f32.mrf.mxu0
    %v563 = vadd.f32 0.0, %v562
    %v564 = vpop.f32.mrf.mxu0
    %565 = vmatprep.mubr.f32.mxu0 0.0
    %566 = vmatmul.mubr.f32.gmra.mxu0 %v464
    %v567 = vpop.f32.mrf.mxu0
    %v568 = vadd.f32 0.0, %v567
    %v569 = vpop.f32.mrf.mxu0
    %570 = vdwg.mxu0
    %v571 = vld [vmem:[#allocation5 + $0x20] sm:$0xff]
    %v572 = vld [vmem:[#allocation5 + $0x28] sm:$0xff]
    %v573 = vld [vmem:[#allocation5 + $0x30] sm:$0xff]
    %v574 = vld [vmem:[#allocation5 + $0x38] sm:$0xff]
    %v576 = vsel %vm191, %v533, 0
    %v579 = vsel %vm191, %v538, 0
    %581 = vmatprep.subr.mxu0 0.0
    %582 = vmatpush1.msra.mxu0 0.0
    %583 = vmatprep.subr.mxu0 0.0
    %584 = vmatpush1.msra.mxu0 0.0
    %585 = vmatprep.subr.mxu0 0.0
    %586 = vmatpush1.msra.mxu0 0.0
    %587 = vmatprep.subr.mxu0 0.0
    %588 = vmatpush1.msra.mxu0 0.0
    %589 = vmatprep.subr.mxu0 0.0
    %590 = vmatpush1.msra.mxu0 0.0
    %591 = vmatprep.subr.mxu0 0.0
    %592 = vmatpush1.msra.mxu0 0.0
    %593 = vmatprep.subr.mxu0 0.0
    %594 = vmatpush1.msra.mxu0 0.0
    %595 = vmatprep.subr.mxu0 0.0
    %596 = vmatpush1.msra.mxu0 0.0
    %597 = vmatprep.subr.mxu0 0.0
    %598 = vmatpush1.msra.mxu0 0.0
    %599 = vmatprep.subr.mxu0 0.0
    %600 = vmatpush1.msra.mxu0 0.0
    %601 = vmatprep.subr.mxu0 0.0
    %602 = vmatpush1.msra.mxu0 0.0
    %603 = vmatprep.subr.mxu0 0.0
    %604 = vmatpush1.msra.mxu0 0.0
    %605 = vmatprep.subr.mxu0 0.0
    %606 = vmatpush1.msra.mxu0 0.0
    %607 = vmatprep.subr.mxu0 0.0
    %608 = vmatpush1.msra.mxu0 0.0
    %609 = vmatprep.subr.mxu0 0.0
    %610 = vmatpush1.msra.mxu0 0.0
    %611 = vmatprep.subr.mxu0 0.0
    %612 = vmatpush1.msra.mxu0 %v571
    %613 = vmatprep.subr.mxu0 0.0
    %614 = vmatpush2.msra.mxu0 0.0
    %615 = vmatprep.subr.mxu0 0.0
    %616 = vmatpush2.msra.mxu0 0.0
    %617 = vmatprep.subr.mxu0 0.0
    %618 = vmatpush2.msra.mxu0 0.0
    %619 = vmatprep.subr.mxu0 0.0
    %620 = vmatpush2.msra.mxu0 0.0
    %621 = vmatprep.subr.mxu0 0.0
    %622 = vmatpush2.msra.mxu0 0.0
    %623 = vmatprep.subr.mxu0 0.0
    %624 = vmatpush2.msra.mxu0 0.0
    %625 = vmatprep.subr.mxu0 0.0
    %626 = vmatpush2.msra.mxu0 0.0
    %627 = vmatprep.subr.mxu0 0.0
    %628 = vmatpush2.msra.mxu0 0.0
    %629 = vmatprep.subr.mxu0 0.0
    %630 = vmatpush2.msra.mxu0 0.0
    %631 = vmatprep.subr.mxu0 0.0
    %632 = vmatpush2.msra.mxu0 0.0
    %633 = vmatprep.subr.mxu0 0.0
    %634 = vmatpush2.msra.mxu0 0.0
    %635 = vmatprep.subr.mxu0 0.0
    %636 = vmatpush2.msra.mxu0 0.0
    %637 = vmatprep.subr.mxu0 0.0
    %638 = vmatpush2.msra.mxu0 0.0
    %639 = vmatprep.subr.mxu0 0.0
    %640 = vmatpush2.msra.mxu0 0.0
    %641 = vmatprep.subr.mxu0 0.0
    %642 = vmatpush2.msra.mxu0 0.0
    %643 = vmatprep.subr.mxu0 0.0
    %644 = vmatpush2.msra.mxu0 0.0
    %645 = vmatprep.mubr.f32.mxu0 0.0
    %646 = vmatmul.mubr.f32.gmra.mxu0 %v576
    %v647 = vpop.f32.mrf.mxu0
    %v648 = vadd.f32 0.0, %v647
    %v649 = vpop.f32.mrf.mxu0
    %650 = vmatprep.mubr.f32.mxu0 0.0
    %651 = vmatmul.mubr.f32.gmra.mxu0 %v579
    %v652 = vpop.f32.mrf.mxu0
    %v653 = vadd.f32 0.0, %v652
    %v654 = vpop.f32.mrf.mxu0
    %655 = vdwg.mxu0
    %v657 = vsel %vm191, %v543, 0
    %v660 = vsel %vm191, %v548, 0
    %662 = vmatprep.subr.mxu0 0.0
    %663 = vmatpush1.msra.mxu0 0.0
    %664 = vmatprep.subr.mxu0 0.0
    %665 = vmatpush1.msra.mxu0 0.0
    %666 = vmatprep.subr.mxu0 0.0
    %667 = vmatpush1.msra.mxu0 0.0
    %668 = vmatprep.subr.mxu0 0.0
    %669 = vmatpush1.msra.mxu0 0.0
    %670 = vmatprep.subr.mxu0 0.0
    %671 = vmatpush1.msra.mxu0 0.0
    %672 = vmatprep.subr.mxu0 0.0
    %673 = vmatpush1.msra.mxu0 0.0
    %674 = vmatprep.subr.mxu0 0.0
    %675 = vmatpush1.msra.mxu0 0.0
    %676 = vmatprep.subr.mxu0 0.0
    %677 = vmatpush1.msra.mxu0 0.0
    %678 = vmatprep.subr.mxu0 0.0
    %679 = vmatpush1.msra.mxu0 0.0
    %680 = vmatprep.subr.mxu0 0.0
    %681 = vmatpush1.msra.mxu0 0.0
    %682 = vmatprep.subr.mxu0 0.0
    %683 = vmatpush1.msra.mxu0 0.0
    %684 = vmatprep.subr.mxu0 0.0
    %685 = vmatpush1.msra.mxu0 0.0
    %686 = vmatprep.subr.mxu0 0.0
    %687 = vmatpush1.msra.mxu0 0.0
    %688 = vmatprep.subr.mxu0 0.0
    %689 = vmatpush1.msra.mxu0 0.0
    %690 = vmatprep.subr.mxu0 0.0
    %691 = vmatpush1.msra.mxu0 0.0
    %692 = vmatprep.subr.mxu0 0.0
    %693 = vmatpush1.msra.mxu0 %v572
    %694 = vmatprep.subr.mxu0 0.0
    %695 = vmatpush2.msra.mxu0 0.0
    %696 = vmatprep.subr.mxu0 0.0
    %697 = vmatpush2.msra.mxu0 0.0
    %698 = vmatprep.subr.mxu0 0.0
    %699 = vmatpush2.msra.mxu0 0.0
    %700 = vmatprep.subr.mxu0 0.0
    %701 = vmatpush2.msra.mxu0 0.0
    %702 = vmatprep.subr.mxu0 0.0
    %703 = vmatpush2.msra.mxu0 0.0
    %704 = vmatprep.subr.mxu0 0.0
    %705 = vmatpush2.msra.mxu0 0.0
    %706 = vmatprep.subr.mxu0 0.0
    %707 = vmatpush2.msra.mxu0 0.0
    %708 = vmatprep.subr.mxu0 0.0
    %709 = vmatpush2.msra.mxu0 0.0
    %710 = vmatprep.subr.mxu0 0.0
    %711 = vmatpush2.msra.mxu0 0.0
    %712 = vmatprep.subr.mxu0 0.0
    %713 = vmatpush2.msra.mxu0 0.0
    %714 = vmatprep.subr.mxu0 0.0
    %715 = vmatpush2.msra.mxu0 0.0
    %716 = vmatprep.subr.mxu0 0.0
    %717 = vmatpush2.msra.mxu0 0.0
    %718 = vmatprep.subr.mxu0 0.0
    %719 = vmatpush2.msra.mxu0 0.0
    %720 = vmatprep.subr.mxu0 0.0
    %721 = vmatpush2.msra.mxu0 0.0
    %722 = vmatprep.subr.mxu0 0.0
    %723 = vmatpush2.msra.mxu0 0.0
    %724 = vmatprep.subr.mxu0 0.0
    %725 = vmatpush2.msra.mxu0 0.0
    %726 = vmatprep.mubr.f32.mxu0 0.0
    %727 = vmatmul.mubr.f32.gmra.mxu0 %v657
    %v728 = vpop.f32.mrf.mxu0
    %v729 = vadd.f32 0.0, %v728
    %v730 = vpop.f32.mrf.mxu0
    %731 = vmatprep.mubr.f32.mxu0 0.0
    %732 = vmatmul.mubr.f32.gmra.mxu0 %v660
    %v733 = vpop.f32.mrf.mxu0
    %v734 = vadd.f32 0.0, %v733
    %v735 = vpop.f32.mrf.mxu0
    %736 = vdwg.mxu0
    %v738 = vsel %vm191, %v553, 0
    %v741 = vsel %vm191, %v558, 0
    %743 = vmatprep.subr.mxu0 0.0
    %744 = vmatpush1.msra.mxu0 0.0
    %745 = vmatprep.subr.mxu0 0.0
    %746 = vmatpush1.msra.mxu0 0.0
    %747 = vmatprep.subr.mxu0 0.0
    %748 = vmatpush1.msra.mxu0 0.0
    %749 = vmatprep.subr.mxu0 0.0
    %750 = vmatpush1.msra.mxu0 0.0
    %751 = vmatprep.subr.mxu0 0.0
    %752 = vmatpush1.msra.mxu0 0.0
    %753 = vmatprep.subr.mxu0 0.0
    %754 = vmatpush1.msra.mxu0 0.0
    %755 = vmatprep.subr.mxu0 0.0
    %756 = vmatpush1.msra.mxu0 0.0
    %757 = vmatprep.subr.mxu0 0.0
    %758 = vmatpush1.msra.mxu0 0.0
    %759 = vmatprep.subr.mxu0 0.0
    %760 = vmatpush1.msra.mxu0 0.0
    %761 = vmatprep.subr.mxu0 0.0
    %762 = vmatpush1.msra.mxu0 0.0
    %763 = vmatprep.subr.mxu0 0.0
    %764 = vmatpush1.msra.mxu0 0.0
    %765 = vmatprep.subr.mxu0 0.0
    %766 = vmatpush1.msra.mxu0 0.0
    %767 = vmatprep.subr.mxu0 0.0
    %768 = vmatpush1.msra.mxu0 0.0
    %769 = vmatprep.subr.mxu0 0.0
    %770 = vmatpush1.msra.mxu0 0.0
    %771 = vmatprep.subr.mxu0 0.0
    %772 = vmatpush1.msra.mxu0 0.0
    %773 = vmatprep.subr.mxu0 0.0
    %774 = vmatpush1.msra.mxu0 %v573
    %775 = vmatprep.subr.mxu0 0.0
    %776 = vmatpush2.msra.mxu0 0.0
    %777 = vmatprep.subr.mxu0 0.0
    %778 = vmatpush2.msra.mxu0 0.0
    %779 = vmatprep.subr.mxu0 0.0
    %780 = vmatpush2.msra.mxu0 0.0
    %781 = vmatprep.subr.mxu0 0.0
    %782 = vmatpush2.msra.mxu0 0.0
    %783 = vmatprep.subr.mxu0 0.0
    %784 = vmatpush2.msra.mxu0 0.0
    %785 = vmatprep.subr.mxu0 0.0
    %786 = vmatpush2.msra.mxu0 0.0
    %787 = vmatprep.subr.mxu0 0.0
    %788 = vmatpush2.msra.mxu0 0.0
    %789 = vmatprep.subr.mxu0 0.0
    %790 = vmatpush2.msra.mxu0 0.0
    %791 = vmatprep.subr.mxu0 0.0
    %792 = vmatpush2.msra.mxu0 0.0
    %793 = vmatprep.subr.mxu0 0.0
    %794 = vmatpush2.msra.mxu0 0.0
    %795 = vmatprep.subr.mxu0 0.0
    %796 = vmatpush2.msra.mxu0 0.0
    %797 = vmatprep.subr.mxu0 0.0
    %798 = vmatpush2.msra.mxu0 0.0
    %799 = vmatprep.subr.mxu0 0.0
    %800 = vmatpush2.msra.mxu0 0.0
    %801 = vmatprep.subr.mxu0 0.0
    %802 = vmatpush2.msra.mxu0 0.0
    %803 = vmatprep.subr.mxu0 0.0
    %804 = vmatpush2.msra.mxu0 0.0
    %805 = vmatprep.subr.mxu0 0.0
    %806 = vmatpush2.msra.mxu0 0.0
    %807 = vmatprep.mubr.f32.mxu0 0.0
    %808 = vmatmul.mubr.f32.gmra.mxu0 %v738
    %v809 = vpop.f32.mrf.mxu0
    %v810 = vadd.f32 0.0, %v809
    %v811 = vpop.f32.mrf.mxu0
    %812 = vmatprep.mubr.f32.mxu0 0.0
    %813 = vmatmul.mubr.f32.gmra.mxu0 %v741
    %v814 = vpop.f32.mrf.mxu0
    %v815 = vadd.f32 0.0, %v814
    %v816 = vpop.f32.mrf.mxu0
    %817 = vdwg.mxu0
    %v819 = vsel %vm191, %v563, 0
    %v822 = vsel %vm191, %v568, 0
    %824 = vmatprep.subr.mxu0 0.0
    %825 = vmatpush1.msra.mxu0 0.0
    %826 = vmatprep.subr.mxu0 0.0
    %827 = vmatpush1.msra.mxu0 0.0
    %828 = vmatprep.subr.mxu0 0.0
    %829 = vmatpush1.msra.mxu0 0.0
    %830 = vmatprep.subr.mxu0 0.0
    %831 = vmatpush1.msra.mxu0 0.0
    %832 = vmatprep.subr.mxu0 0.0
    %833 = vmatpush1.msra.mxu0 0.0
    %834 = vmatprep.subr.mxu0 0.0
    %835 = vmatpush1.msra.mxu0 0.0
    %836 = vmatprep.subr.mxu0 0.0
    %837 = vmatpush1.msra.mxu0 0.0
    %838 = vmatprep.subr.mxu0 0.0
    %839 = vmatpush1.msra.mxu0 0.0
    %840 = vmatprep.subr.mxu0 0.0
    %841 = vmatpush1.msra.mxu0 0.0
    %842 = vmatprep.subr.mxu0 0.0
    %843 = vmatpush1.msra.mxu0 0.0
    %844 = vmatprep.subr.mxu0 0.0
    %845 = vmatpush1.msra.mxu0 0.0
    %846 = vmatprep.subr.mxu0 0.0
    %847 = vmatpush1.msra.mxu0 0.0
    %848 = vmatprep.subr.mxu0 0.0
    %849 = vmatpush1.msra.mxu0 0.0
    %850 = vmatprep.subr.mxu0 0.0
    %851 = vmatpush1.msra.mxu0 0.0
    %852 = vmatprep.subr.mxu0 0.0
    %853 = vmatpush1.msra.mxu0 0.0
    %854 = vmatprep.subr.mxu0 0.0
    %855 = vmatpush1.msra.mxu0 %v574
    %856 = vmatprep.subr.mxu0 0.0
    %857 = vmatpush2.msra.mxu0 0.0
    %858 = vmatprep.subr.mxu0 0.0
    %859 = vmatpush2.msra.mxu0 0.0
    %860 = vmatprep.subr.mxu0 0.0
    %861 = vmatpush2.msra.mxu0 0.0
    %862 = vmatprep.subr.mxu0 0.0
    %863 = vmatpush2.msra.mxu0 0.0
    %864 = vmatprep.subr.mxu0 0.0
    %865 = vmatpush2.msra.mxu0 0.0
    %866 = vmatprep.subr.mxu0 0.0
    %867 = vmatpush2.msra.mxu0 0.0
    %868 = vmatprep.subr.mxu0 0.0
    %869 = vmatpush2.msra.mxu0 0.0
    %870 = vmatprep.subr.mxu0 0.0
    %871 = vmatpush2.msra.mxu0 0.0
    %872 = vmatprep.subr.mxu0 0.0
    %873 = vmatpush2.msra.mxu0 0.0
    %874 = vmatprep.subr.mxu0 0.0
    %875 = vmatpush2.msra.mxu0 0.0
    %876 = vmatprep.subr.mxu0 0.0
    %877 = vmatpush2.msra.mxu0 0.0
    %878 = vmatprep.subr.mxu0 0.0
    %879 = vmatpush2.msra.mxu0 0.0
    %880 = vmatprep.subr.mxu0 0.0
    %881 = vmatpush2.msra.mxu0 0.0
    %882 = vmatprep.subr.mxu0 0.0
    %883 = vmatpush2.msra.mxu0 0.0
    %884 = vmatprep.subr.mxu0 0.0
    %885 = vmatpush2.msra.mxu0 0.0
    %886 = vmatprep.subr.mxu0 0.0
    %887 = vmatpush2.msra.mxu0 0.0
    %888 = vmatprep.mubr.f32.mxu0 0.0
    %889 = vmatmul.mubr.f32.gmra.mxu0 %v819
    %v890 = vpop.f32.mrf.mxu0
    %v891 = vadd.f32 0.0, %v890
    %v892 = vpop.f32.mrf.mxu0
    %893 = vmatprep.mubr.f32.mxu0 0.0
    %894 = vmatmul.mubr.f32.gmra.mxu0 %v822
    %v895 = vpop.f32.mrf.mxu0
    %v896 = vadd.f32 0.0, %v895
    %v897 = vpop.f32.mrf.mxu0
    %898 = vdwg.mxu0
    %v899 = vadd.f32 %v648, %v729
    %v900 = vadd.f32 %v899, %v810
    %v901 = vadd.f32 %v900, %v891
    %v902 = vadd.f32 %v653, %v734
    %v903 = vadd.f32 %v902, %v815
    %v904 = vadd.f32 %v903, %v896
    %v905 = vld [vmem:[#allocation5 + $0xe1] sm:$0x1]
    %v906 = vlaneseq
    %v907 = vshrl.u32 %v906, 7
    %v908 = vsub.s32 0, %v907
    %v909 = vrot.slane %v905, %v908
    %v910 = vadd.f32 %v901, %v909
    %v911 = vadd.f32 %v904, %v909
    %v912 = vadd.f32 %v60, %v910
    %v913 = vadd.f32 %v61, %v911
    %v914 = vld [vmem:[#allocation5 + $0xe4] sm:$0x1]
    %v915 = vld [vmem:[#allocation5 + $0xe5] sm:$0x1]
    %v916 = vsel %vm79, %v912, 0.0
    %917 = vadd.xlane.f32.xlu0 %v916
    %v918 = vpop.xlane.xlu0 %917
    %v919 = vsel %vm79, %v913, 0.0
    %920 = vadd.xlane.f32.xlu0 %v919
    %v921 = vpop.xlane.xlu0 %920
    %v922 = vmul.f32 %v918, 0.03125
    %v923 = vmul.f32 %v921, 0.03125
    %v924 = vsub.f32 %v912, %v922
    %v925 = vsub.f32 %v913, %v923
    %v926 = vmul.f32 %v924, %v924
    %v927 = vmul.f32 %v925, %v925
    %v928 = vsel %vm79, %v926, 0.0
    %929 = vadd.xlane.f32.xlu0 %v928
    %v930 = vpop.xlane.xlu0 %929
    %v931 = vsel %vm79, %v927, 0.0
    %932 = vadd.xlane.f32.xlu0 %v931
    %v933 = vpop.xlane.xlu0 %932
    %v934 = vmul.f32 %v930, 0.03125
    %v935 = vmul.f32 %v933, 0.03125
    %v936 = vadd.f32 %v934, 1e-05
    %v937 = vadd.f32 %v935, 1e-05
    %v938 = vrsqrt.pop %v936
    %v939 = vrsqrt.pop %v937
    %v940 = vmul.f32 %v924, %v938
    %v941 = vmul.f32 %v925, %v939
    %v942 = vlaneseq
    %v943 = vshrl.u32 %v942, 7
    %v944 = vsub.s32 0, %v943
    %v945 = vrot.slane %v914, %v944
    %v946 = vmul.f32 %v940, %v945
    %v947 = vmul.f32 %v941, %v945
    %v948 = vlaneseq
    %v949 = vshrl.u32 %v948, 7
    %v950 = vsub.s32 0, %v949
    %v951 = vrot.slane %v915, %v950
    %v952 = vadd.f32 %v946, %v951
    %v953 = vadd.f32 %v947, %v951
    %v954 = vld [vmem:[#allocation5 + $0x40] sm:$0xff]
    %v955 = vld [vmem:[#allocation5 + $0x48] sm:$0xff]
    %v956 = vld [vmem:[#allocation5 + $0x50] sm:$0xff]
    %v957 = vld [vmem:[#allocation5 + $0x58] sm:$0xff]
    %v958 = vld [vmem:[#allocation5 + $0xe2] sm:$0x1]
    %v959 = vlaneseq
    %v960 = vshrl.u32 %v959, 7
    %v961 = vsub.s32 0, %v960
    %v962 = vrot.slane %v958, %v961
    %v964 = vsel %vm79, %v952, 0
    %v967 = vsel %vm79, %v953, 0
    %969 = vmatprep.subr.mxu0 0.0
    %970 = vmatpush1.msra.mxu0 0.0
    %971 = vmatprep.subr.mxu0 0.0
    %972 = vmatpush1.msra.mxu0 0.0
    %973 = vmatprep.subr.mxu0 0.0
    %974 = vmatpush1.msra.mxu0 0.0
    %975 = vmatprep.subr.mxu0 0.0
    %976 = vmatpush1.msra.mxu0 0.0
    %977 = vmatprep.subr.mxu0 0.0
    %978 = vmatpush1.msra.mxu0 0.0
    %979 = vmatprep.subr.mxu0 0.0
    %980 = vmatpush1.msra.mxu0 0.0
    %981 = vmatprep.subr.mxu0 0.0
    %982 = vmatpush1.msra.mxu0 0.0
    %983 = vmatprep.subr.mxu0 0.0
    %984 = vmatpush1.msra.mxu0 0.0
    %985 = vmatprep.subr.mxu0 0.0
    %986 = vmatpush1.msra.mxu0 0.0
    %987 = vmatprep.subr.mxu0 0.0
    %988 = vmatpush1.msra.mxu0 0.0
    %989 = vmatprep.subr.mxu0 0.0
    %990 = vmatpush1.msra.mxu0 0.0
    %991 = vmatprep.subr.mxu0 0.0
    %992 = vmatpush1.msra.mxu0 0.0
    %993 = vmatprep.subr.mxu0 0.0
    %994 = vmatpush1.msra.mxu0 %v957
    %995 = vmatprep.subr.mxu0 0.0
    %996 = vmatpush1.msra.mxu0 %v956
    %997 = vmatprep.subr.mxu0 0.0
    %998 = vmatpush1.msra.mxu0 %v955
    %999 = vmatprep.subr.mxu0 0.0
    %1000 = vmatpush1.msra.mxu0 %v954
    %1001 = vmatprep.subr.mxu0 0.0
    %1002 = vmatpush2.msra.mxu0 0.0
    %1003 = vmatprep.subr.mxu0 0.0
    %1004 = vmatpush2.msra.mxu0 0.0
    %1005 = vmatprep.subr.mxu0 0.0
    %1006 = vmatpush2.msra.mxu0 0.0
    %1007 = vmatprep.subr.mxu0 0.0
    %1008 = vmatpush2.msra.mxu0 0.0
    %1009 = vmatprep.subr.mxu0 0.0
    %1010 = vmatpush2.msra.mxu0 0.0
    %1011 = vmatprep.subr.mxu0 0.0
    %1012 = vmatpush2.msra.mxu0 0.0
    %1013 = vmatprep.subr.mxu0 0.0
    %1014 = vmatpush2.msra.mxu0 0.0
    %1015 = vmatprep.subr.mxu0 0.0
    %1016 = vmatpush2.msra.mxu0 0.0
    %1017 = vmatprep.subr.mxu0 0.0
    %1018 = vmatpush2.msra.mxu0 0.0
    %1019 = vmatprep.subr.mxu0 0.0
    %1020 = vmatpush2.msra.mxu0 0.0
    %1021 = vmatprep.subr.mxu0 0.0
    %1022 = vmatpush2.msra.mxu0 0.0
    %1023 = vmatprep.subr.mxu0 0.0
    %1024 = vmatpush2.msra.mxu0 0.0
    %1025 = vmatprep.subr.mxu0 0.0
    %1026 = vmatpush2.msra.mxu0 0.0
    %1027 = vmatprep.subr.mxu0 0.0
    %1028 = vmatpush2.msra.mxu0 0.0
    %1029 = vmatprep.subr.mxu0 0.0
    %1030 = vmatpush2.msra.mxu0 0.0
    %1031 = vmatprep.subr.mxu0 0.0
    %1032 = vmatpush2.msra.mxu0 0.0
    %1033 = vmatprep.mubr.f32.mxu0 0.0
    %1034 = vmatmul.mubr.f32.gmra.mxu0 %v964
    %v1035 = vpop.f32.mrf.mxu0
    %v1036 = vadd.f32 %v962, %v1035
    %v1037 = vpop.f32.mrf.mxu0
    %1038 = vmatprep.mubr.f32.mxu0 0.0
    %1039 = vmatmul.mubr.f32.gmra.mxu0 %v967
    %v1040 = vpop.f32.mrf.mxu0
    %v1041 = vadd.f32 %v962, %v1040
    %v1042 = vpop.f32.mrf.mxu0
    %1043 = vdwg.mxu0
    %v1044 = vmax.f32 %v1036, 0.0
    %v1045 = vmax.f32 %v1041, 0.0
    %v1046 = vld [vmem:[#allocation5 + $0x60] sm:$0xff]
    %v1047 = vld [vmem:[#allocation5 + $0x68] sm:$0xff]
    %v1048 = vld [vmem:[#allocation5 + $0x70] sm:$0xff]
    %v1049 = vld [vmem:[#allocation5 + $0x78] sm:$0xff]
    %v1050 = vld [vmem:[#allocation5 + $0x80] sm:$0xff]
    %v1051 = vld [vmem:[#allocation5 + $0x88] sm:$0xff]
    %v1052 = vld [vmem:[#allocation5 + $0x90] sm:$0xff]
    %v1053 = vld [vmem:[#allocation5 + $0x98] sm:$0xff]
    %v1054 = vld [vmem:[#allocation5 + $0xa0] sm:$0xff]
    %v1055 = vld [vmem:[#allocation5 + $0xa8] sm:$0xff]
    %v1056 = vld [vmem:[#allocation5 + $0xb0] sm:$0xff]
    %v1057 = vld [vmem:[#allocation5 + $0xb8] sm:$0xff]
    %v1058 = vld [vmem:[#allocation5 + $0xc0] sm:$0xff]
    %v1059 = vld [vmem:[#allocation5 + $0xc8] sm:$0xff]
    %v1060 = vld [vmem:[#allocation5 + $0xd0] sm:$0xff]
    %v1061 = vld [vmem:[#allocation5 + $0xd8] sm:$0xff]
    %v1062 = vld [vmem:[#allocation5 + $0xe3] sm:$0x1]
    %v1063 = vlaneseq
    %v1064 = vshrl.u32 %v1063, 7
    %v1065 = vsub.s32 0, %v1064
    %v1066 = vrot.slane %v1062, %v1065
    %1067 = vmatprep.subr.mxu0 0.0
    %1068 = vmatpush1.msra.mxu0 %v1061
    %1069 = vmatprep.subr.mxu0 0.0
    %1070 = vmatpush1.msra.mxu0 %v1060
    %1071 = vmatprep.subr.mxu0 0.0
    %1072 = vmatpush1.msra.mxu0 %v1059
    %1073 = vmatprep.subr.mxu0 0.0
    %1074 = vmatpush1.msra.mxu0 %v1058
    %1075 = vmatprep.subr.mxu0 0.0
    %1076 = vmatpush1.msra.mxu0 %v1057
    %1077 = vmatprep.subr.mxu0 0.0
    %1078 = vmatpush1.msra.mxu0 %v1056
    %1079 = vmatprep.subr.mxu0 0.0
    %1080 = vmatpush1.msra.mxu0 %v1055
    %1081 = vmatprep.subr.mxu0 0.0
    %1082 = vmatpush1.msra.mxu0 %v1054
    %1083 = vmatprep.subr.mxu0 0.0
    %1084 = vmatpush1.msra.mxu0 %v1053
    %1085 = vmatprep.subr.mxu0 0.0
    %1086 = vmatpush1.msra.mxu0 %v1052
    %1087 = vmatprep.subr.mxu0 0.0
    %1088 = vmatpush1.msra.mxu0 %v1051
    %1089 = vmatprep.subr.mxu0 0.0
    %1090 = vmatpush1.msra.mxu0 %v1050
    %1091 = vmatprep.subr.mxu0 0.0
    %1092 = vmatpush1.msra.mxu0 %v1049
    %1093 = vmatprep.subr.mxu0 0.0
    %1094 = vmatpush1.msra.mxu0 %v1048
    %1095 = vmatprep.subr.mxu0 0.0
    %1096 = vmatpush1.msra.mxu0 %v1047
    %1097 = vmatprep.subr.mxu0 0.0
    %1098 = vmatpush1.msra.mxu0 %v1046
    %1099 = vmatprep.subr.mxu0 0.0
    %1100 = vmatpush2.msra.mxu0 0.0
    %1101 = vmatprep.subr.mxu0 0.0
    %1102 = vmatpush2.msra.mxu0 0.0
    %1103 = vmatprep.subr.mxu0 0.0
    %1104 = vmatpush2.msra.mxu0 0.0
    %1105 = vmatprep.subr.mxu0 0.0
    %1106 = vmatpush2.msra.mxu0 0.0
    %1107 = vmatprep.subr.mxu0 0.0
    %1108 = vmatpush2.msra.mxu0 0.0
    %1109 = vmatprep.subr.mxu0 0.0
    %1110 = vmatpush2.msra.mxu0 0.0
    %1111 = vmatprep.subr.mxu0 0.0
    %1112 = vmatpush2.msra.mxu0 0.0
    %1113 = vmatprep.subr.mxu0 0.0
    %1114 = vmatpush2.msra.mxu0 0.0
    %1115 = vmatprep.subr.mxu0 0.0
    %1116 = vmatpush2.msra.mxu0 0.0
    %1117 = vmatprep.subr.mxu0 0.0
    %1118 = vmatpush2.msra.mxu0 0.0
    %1119 = vmatprep.subr.mxu0 0.0
    %1120 = vmatpush2.msra.mxu0 0.0
    %1121 = vmatprep.subr.mxu0 0.0
    %1122 = vmatpush2.msra.mxu0 0.0
    %1123 = vmatprep.subr.mxu0 0.0
    %1124 = vmatpush2.msra.mxu0 0.0
    %1125 = vmatprep.subr.mxu0 0.0
    %1126 = vmatpush2.msra.mxu0 0.0
    %1127 = vmatprep.subr.mxu0 0.0
    %1128 = vmatpush2.msra.mxu0 0.0
    %1129 = vmatprep.subr.mxu0 0.0
    %1130 = vmatpush2.msra.mxu0 0.0
    %1131 = vmatprep.mubr.f32.mxu0 0.0
    %1132 = vmatmul.mubr.f32.gmra.mxu0 %v1044
    %v1133 = vpop.f32.mrf.mxu0
    %v1134 = vadd.f32 %v1066, %v1133
    %v1135 = vpop.f32.mrf.mxu0
    %1136 = vmatprep.mubr.f32.mxu0 0.0
    %1137 = vmatmul.mubr.f32.gmra.mxu0 %v1045
    %v1138 = vpop.f32.mrf.mxu0
    %v1139 = vadd.f32 %v1066, %v1138
    %v1140 = vpop.f32.mrf.mxu0
    %1141 = vdwg.mxu0
    %v1142 = vadd.f32 %v952, %v1134
    %v1143 = vadd.f32 %v953, %v1139
    %v1144 = vld [vmem:[#allocation5 + $0xe6] sm:$0x1]
    %v1145 = vld [vmem:[#allocation5 + $0xe7] sm:$0x1]
    %v1146 = vsel %vm79, %v1142, 0.0
    %1147 = vadd.xlane.f32.xlu0 %v1146
    %v1148 = vpop.xlane.xlu0 %1147
    %v1149 = vsel %vm79, %v1143, 0.0
    %1150 = vadd.xlane.f32.xlu0 %v1149
    %v1151 = vpop.xlane.xlu0 %1150
    %v1152 = vmul.f32 %v1148, 0.03125
    %v1153 = vmul.f32 %v1151, 0.03125
    %v1154 = vsub.f32 %v1142, %v1152
    %v1155 = vsub.f32 %v1143, %v1153
    %v1156 = vmul.f32 %v1154, %v1154
    %v1157 = vmul.f32 %v1155, %v1155
    %v1158 = vsel %vm79, %v1156, 0.0
    %1159 = vadd.xlane.f32.xlu0 %v1158
    %v1160 = vpop.xlane.xlu0 %1159
    %v1161 = vsel %vm79, %v1157, 0.0
    %1162 = vadd.xlane.f32.xlu0 %v1161
    %v1163 = vpop.xlane.xlu0 %1162
    %v1164 = vmul.f32 %v1160, 0.03125
    %v1165 = vmul.f32 %v1163, 0.03125
    %v1166 = vadd.f32 %v1164, 1e-05
    %v1167 = vadd.f32 %v1165, 1e-05
    %v1168 = vrsqrt.pop %v1166
    %v1169 = vrsqrt.pop %v1167
    %v1170 = vmul.f32 %v1154, %v1168
    %v1171 = vmul.f32 %v1155, %v1169
    %v1172 = vlaneseq
    %v1173 = vshrl.u32 %v1172, 7
    %v1174 = vsub.s32 0, %v1173
    %v1175 = vrot.slane %v1144, %v1174
    %v1176 = vmul.f32 %v1170, %v1175
    %v1177 = vmul.f32 %v1171, %v1175
    %v1178 = vlaneseq
    %v1179 = vshrl.u32 %v1178, 7
    %v1180 = vsub.s32 0, %v1179
    %v1181 = vrot.slane %v1145, %v1180
    %v1182 = vadd.f32 %v1176, %v1181
    %v1183 = vadd.f32 %v1177, %v1181
    %s1184 = scalar_lea.vmem [#allocation5], 232
    %v1185 = vld [vmem:[%s1184] sm:$0xff]
    %v1186 = vld [vmem:[%s1184 + $0x8] sm:$0xff]
    %v1187 = vld [vmem:[%s1184 + $0x10] sm:$0xff]
    %v1188 = vld [vmem:[%s1184 + $0x18] sm:$0xff]
    %v1189 = vld [vmem:[%s1184 + $0xe0] sm:$0x1]
    %v1190 = vlaneseq
    %v1191 = vshrl.u32 %v1190, 7
    %v1192 = vsub.s32 0, %v1191
    %v1193 = vrot.slane %v1189, %v1192
    %v1195 = vsel %vm79, %v1182, 0
    %v1198 = vsel %vm79, %v1183, 0
    %1200 = vmatprep.subr.mxu0 0.0
    %1201 = vmatpush1.msra.mxu0 0.0
    %1202 = vmatprep.subr.mxu0 0.0
    %1203 = vmatpush1.msra.mxu0 0.0
    %1204 = vmatprep.subr.mxu0 0.0
    %1205 = vmatpush1.msra.mxu0 0.0
    %1206 = vmatprep.subr.mxu0 0.0
    %1207 = vmatpush1.msra.mxu0 0.0
    %1208 = vmatprep.subr.mxu0 0.0
    %1209 = vmatpush1.msra.mxu0 0.0
    %1210 = vmatprep.subr.mxu0 0.0
    %1211 = vmatpush1.msra.mxu0 0.0
    %1212 = vmatprep.subr.mxu0 0.0
    %1213 = vmatpush1.msra.mxu0 0.0
    %1214 = vmatprep.subr.mxu0 0.0
    %1215 = vmatpush1.msra.mxu0 0.0
    %1216 = vmatprep.subr.mxu0 0.0
    %1217 = vmatpush1.msra.mxu0 0.0
    %1218 = vmatprep.subr.mxu0 0.0
    %1219 = vmatpush1.msra.mxu0 0.0
    %1220 = vmatprep.subr.mxu0 0.0
    %1221 = vmatpush1.msra.mxu0 0.0
    %1222 = vmatprep.subr.mxu0 0.0
    %1223 = vmatpush1.msra.mxu0 0.0
    %1224 = vmatprep.subr.mxu0 0.0
    %1225 = vmatpush1.msra.mxu0 %v1188
    %1226 = vmatprep.subr.mxu0 0.0
    %1227 = vmatpush1.msra.mxu0 %v1187
    %1228 = vmatprep.subr.mxu0 0.0
    %1229 = vmatpush1.msra.mxu0 %v1186
    %1230 = vmatprep.subr.mxu0 0.0
    %1231 = vmatpush1.msra.mxu0 %v1185
    %1232 = vmatprep.subr.mxu0 0.0
    %1233 = vmatpush2.msra.mxu0 0.0
    %1234 = vmatprep.subr.mxu0 0.0
    %1235 = vmatpush2.msra.mxu0 0.0
    %1236 = vmatprep.subr.mxu0 0.0
    %1237 = vmatpush2.msra.mxu0 0.0
    %1238 = vmatprep.subr.mxu0 0.0
    %1239 = vmatpush2.msra.mxu0 0.0
    %1240 = vmatprep.subr.mxu0 0.0
    %1241 = vmatpush2.msra.mxu0 0.0
    %1242 = vmatprep.subr.mxu0 0.0
    %1243 = vmatpush2.msra.mxu0 0.0
    %1244 = vmatprep.subr.mxu0 0.0
    %1245 = vmatpush2.msra.mxu0 0.0
    %1246 = vmatprep.subr.mxu0 0.0
    %1247 = vmatpush2.msra.mxu0 0.0
    %1248 = vmatprep.subr.mxu0 0.0
    %1249 = vmatpush2.msra.mxu0 0.0
    %1250 = vmatprep.subr.mxu0 0.0
    %1251 = vmatpush2.msra.mxu0 0.0
    %1252 = vmatprep.subr.mxu0 0.0
    %1253 = vmatpush2.msra.mxu0 0.0
    %1254 = vmatprep.subr.mxu0 0.0
    %1255 = vmatpush2.msra.mxu0 0.0
    %1256 = vmatprep.subr.mxu0 0.0
    %1257 = vmatpush2.msra.mxu0 0.0
    %1258 = vmatprep.subr.mxu0 0.0
    %1259 = vmatpush2.msra.mxu0 0.0
    %1260 = vmatprep.subr.mxu0 0.0
    %1261 = vmatpush2.msra.mxu0 0.0
    %1262 = vmatprep.subr.mxu0 0.0
    %1263 = vmatpush2.msra.mxu0 0.0
    %1264 = vmatprep.mubr.f32.mxu0 0.0
    %1265 = vmatmul.mubr.f32.gmra.mxu0 %v1195
    %v1266 = vpop.f32.mrf.mxu0
    %v1267 = vadd.f32 %v1193, %v1266
    %v1268 = vpop.f32.mrf.mxu0
    %1269 = vmatprep.mubr.f32.mxu0 0.0
    %1270 = vmatmul.mubr.f32.gmra.mxu0 %v1198
    %v1271 = vpop.f32.mrf.mxu0
    %v1272 = vadd.f32 %v1193, %v1271
    %v1273 = vpop.f32.mrf.mxu0
    %1274 = vdwg.mxu0
    %1277 = vrot.lane.b32.xlu0 %v1267, 120
    %v1278 = vpop.permute.xlu0 %1277
    %1279 = vrot.lane.b32.xlu0 %v1272, 120
    %v1280 = vpop.permute.xlu0 %1279
    %1281 = vrot.lane.b32.xlu0 %v1267, 112
    %v1282 = vpop.permute.xlu0 %1281
    %1283 = vrot.lane.b32.xlu0 %v1272, 112
    %v1284 = vpop.permute.xlu0 %1283
    %1285 = vrot.lane.b32.xlu0 %v1267, 104
    %v1286 = vpop.permute.xlu0 %1285
    %1287 = vrot.lane.b32.xlu0 %v1272, 104
    %v1288 = vpop.permute.xlu0 %1287
    %1289 = vrot.lane.b32.xlu0 %v1267, 96
    %v1290 = vpop.permute.xlu0 %1289
    %1291 = vrot.lane.b32.xlu0 %v1272, 96
    %v1292 = vpop.permute.xlu0 %1291
    %1293 = vrot.lane.b32.xlu0 %v1278, 96
    %v1294 = vpop.permute.xlu0 %1293
    %1295 = vrot.lane.b32.xlu0 %v1280, 96
    %v1296 = vpop.permute.xlu0 %1295
    %1297 = vrot.lane.b32.xlu0 %v1282, 96
    %v1298 = vpop.permute.xlu0 %1297
    %1299 = vrot.lane.b32.xlu0 %v1284, 96
    %v1300 = vpop.permute.xlu0 %1299
    %1301 = vrot.lane.b32.xlu0 %v1286, 96
    %v1302 = vpop.permute.xlu0 %1301
    %1303 = vrot.lane.b32.xlu0 %v1288, 96
    %v1304 = vpop.permute.xlu0 %1303
    %v1305 = vsel %vm191, %v1267, 0
    %v1307 = vsel %vm191, %v1272, 0
    %v1309 = vsel %vm191, %v1278, 0
    %v1311 = vsel %vm191, %v1280, 0
    %v1313 = vsel %vm191, %v1282, 0
    %v1315 = vsel %vm191, %v1284, 0
    %v1317 = vsel %vm191, %v1286, 0
    %v1319 = vsel %vm191, %v1288, 0
    %v1321 = vsel %vm191, %v1290, 0
    %v1323 = vsel %vm191, %v1292, 0
    %v1325 = vsel %vm191, %v1294, 0
    %v1327 = vsel %vm191, %v1296, 0
    %v1329 = vsel %vm191, %v1298, 0
    %v1331 = vsel %vm191, %v1300, 0
    %v1333 = vsel %vm191, %v1302, 0
    %v1335 = vsel %vm191, %v1304, 0
    %1337 = vmatprep.subr.mxu0 0.0
    %1338 = vmatpush1.xpose.msra.mxu0 0.0
    %1339 = vmatprep.subr.mxu0 0.0
    %1340 = vmatpush1.xpose.msra.mxu0 0.0
    %1341 = vmatprep.subr.mxu0 0.0
    %1342 = vmatpush1.xpose.msra.mxu0 0.0
    %1343 = vmatprep.subr.mxu0 0.0
    %1344 = vmatpush1.xpose.msra.mxu0 0.0
    %1345 = vmatprep.subr.mxu0 0.0
    %1346 = vmatpush1.xpose.msra.mxu0 0.0
    %1347 = vmatprep.subr.mxu0 0.0
    %1348 = vmatpush1.xpose.msra.mxu0 0.0
    %1349 = vmatprep.subr.mxu0 0.0
    %1350 = vmatpush1.xpose.msra.mxu0 0.0
    %1351 = vmatprep.subr.mxu0 0.0
    %1352 = vmatpush1.xpose.msra.mxu0 0.0
    %1353 = vmatprep.subr.mxu0 0.0
    %1354 = vmatpush1.xpose.msra.mxu0 %v1335
    %1355 = vmatprep.subr.mxu0 0.0
    %1356 = vmatpush1.xpose.msra.mxu0 %v1333
    %1357 = vmatprep.subr.mxu0 0.0
    %1358 = vmatpush1.xpose.msra.mxu0 %v1331
    %1359 = vmatprep.subr.mxu0 0.0
    %1360 = vmatpush1.xpose.msra.mxu0 %v1329
    %1361 = vmatprep.subr.mxu0 0.0
    %1362 = vmatpush1.xpose.msra.mxu0 %v1327
    %1363 = vmatprep.subr.mxu0 0.0
    %1364 = vmatpush1.xpose.msra.mxu0 %v1325
    %1365 = vmatprep.subr.mxu0 0.0
    %1366 = vmatpush1.xpose.msra.mxu0 %v1323
    %1367 = vmatprep.subr.mxu0 0.0
    %1368 = vmatpush1.xpose.msra.mxu0 %v1321
    %1369 = vmatprep.subr.mxu0 0.0
    %1370 = vmatpush2.xpose.msra.mxu0 0.0
    %1371 = vmatprep.subr.mxu0 0.0
    %1372 = vmatpush2.xpose.msra.mxu0 0.0
    %1373 = vmatprep.subr.mxu0 0.0
    %1374 = vmatpush2.xpose.msra.mxu0 0.0
    %1375 = vmatprep.subr.mxu0 0.0
    %1376 = vmatpush2.xpose.msra.mxu0 0.0
    %1377 = vmatprep.subr.mxu0 0.0
    %1378 = vmatpush2.xpose.msra.mxu0 0.0
    %1379 = vmatprep.subr.mxu0 0.0
    %1380 = vmatpush2.xpose.msra.mxu0 0.0
    %1381 = vmatprep.subr.mxu0 0.0
    %1382 = vmatpush2.xpose.msra.mxu0 0.0
    %1383 = vmatprep.subr.mxu0 0.0
    %1384 = vmatpush2.xpose.msra.mxu0 0.0
    %1385 = vmatprep.subr.mxu0 0.0
    %1386 = vmatpush2.xpose.msra.mxu0 0.0
    %1387 = vmatprep.subr.mxu0 0.0
    %1388 = vmatpush2.xpose.msra.mxu0 0.0
    %1389 = vmatprep.subr.mxu0 0.0
    %1390 = vmatpush2.xpose.msra.mxu0 0.0
    %1391 = vmatprep.subr.mxu0 0.0
    %1392 = vmatpush2.xpose.msra.mxu0 0.0
    %1393 = vmatprep.subr.mxu0 0.0
    %1394 = vmatpush2.xpose.msra.mxu0 0.0
    %1395 = vmatprep.subr.mxu0 0.0
    %1396 = vmatpush2.xpose.msra.mxu0 0.0
    %1397 = vmatprep.subr.mxu0 0.0
    %1398 = vmatpush2.xpose.msra.mxu0 0.0
    %1399 = vmatprep.subr.mxu0 0.0
    %1400 = vmatpush2.xpose.msra.mxu0 0.0
    %1401 = vmatprep.mubr.f32.mxu0 0.0
    %1402 = vmatmul.mubr.f32.gmra.mxu0 %v1305
    %v1403 = vpop.f32.mrf.mxu0
    %v1404 = vadd.f32 %v62, %v1403
    %v1405 = vpop.f32.mrf.mxu0
    %1406 = vmatprep.mubr.f32.mxu0 0.0
    %1407 = vmatmul.mubr.f32.gmra.mxu0 %v1307
    %v1408 = vpop.f32.mrf.mxu0
    %v1409 = vadd.f32 %v63, %v1408
    %v1410 = vpop.f32.mrf.mxu0
    %1411 = vmatprep.mubr.f32.mxu0 0.0
    %1412 = vmatmul.mubr.f32.gmra.mxu0 %v1309
    %v1413 = vpop.f32.mrf.mxu0
    %v1414 = vadd.f32 %v64, %v1413
    %v1415 = vpop.f32.mrf.mxu0
    %1416 = vmatprep.mubr.f32.mxu0 0.0
    %1417 = vmatmul.mubr.f32.gmra.mxu0 %v1311
    %v1418 = vpop.f32.mrf.mxu0
    %v1419 = vadd.f32 %v65, %v1418
    %v1420 = vpop.f32.mrf.mxu0
    %1421 = vmatprep.mubr.f32.mxu0 0.0
    %1422 = vmatmul.mubr.f32.gmra.mxu0 %v1313
    %v1423 = vpop.f32.mrf.mxu0
    %v1424 = vadd.f32 %v66, %v1423
    %v1425 = vpop.f32.mrf.mxu0
    %1426 = vmatprep.mubr.f32.mxu0 0.0
    %1427 = vmatmul.mubr.f32.gmra.mxu0 %v1315
    %v1428 = vpop.f32.mrf.mxu0
    %v1429 = vadd.f32 %v67, %v1428
    %v1430 = vpop.f32.mrf.mxu0
    %1431 = vmatprep.mubr.f32.mxu0 0.0
    %1432 = vmatmul.mubr.f32.gmra.mxu0 %v1317
    %v1433 = vpop.f32.mrf.mxu0
    %v1434 = vadd.f32 %v68, %v1433
    %v1435 = vpop.f32.mrf.mxu0
    %1436 = vmatprep.mubr.f32.mxu0 0.0
    %1437 = vmatmul.mubr.f32.gmra.mxu0 %v1319
    %v1438 = vpop.f32.mrf.mxu0
    %v1439 = vadd.f32 %v69, %v1438
    %v1440 = vpop.f32.mrf.mxu0
    %1441 = vdwg.mxu0
    %v1442 = vsel %vm329, %v1404, -inf
    %1443 = vmax.xlane.f32.xlu0 %v1442
    %v1444 = vpop.xlane.xlu0 %1443
    %v1445 = vsel %vm329, %v1409, -inf
    %1446 = vmax.xlane.f32.xlu0 %v1445
    %v1447 = vpop.xlane.xlu0 %1446
    %v1448 = vsel %vm329, %v1414, -inf
    %1449 = vmax.xlane.f32.xlu0 %v1448
    %v1450 = vpop.xlane.xlu0 %1449
    %v1451 = vsel %vm329, %v1419, -inf
    %1452 = vmax.xlane.f32.xlu0 %v1451
    %v1453 = vpop.xlane.xlu0 %1452
    %v1454 = vsel %vm329, %v1424, -inf
    %1455 = vmax.xlane.f32.xlu0 %v1454
    %v1456 = vpop.xlane.xlu0 %1455
    %v1457 = vsel %vm329, %v1429, -inf
    %1458 = vmax.xlane.f32.xlu0 %v1457
    %v1459 = vpop.xlane.xlu0 %1458
    %v1460 = vsel %vm329, %v1434, -inf
    %1461 = vmax.xlane.f32.xlu0 %v1460
    %v1462 = vpop.xlane.xlu0 %1461
    %v1463 = vsel %vm329, %v1439, -inf
    %1464 = vmax.xlane.f32.xlu0 %v1463
    %v1465 = vpop.xlane.xlu0 %1464
    %v1466 = vsub.f32 %v1404, %v1444
    %v1467 = vsub.f32 %v1409, %v1447
    %v1468 = vsub.f32 %v1414, %v1450
    %v1469 = vsub.f32 %v1419, %v1453
    %v1470 = vsub.f32 %v1424, %v1456
    %v1471 = vsub.f32 %v1429, %v1459
    %v1472 = vsub.f32 %v1434, %v1462
    %v1473 = vsub.f32 %v1439, %v1465
    %v1474 = vmul.f32 %v1466, 1.442695
    %v1475 = vpow.pop %v1474
    %v1476 = vmul.f32 %v1467, 1.442695
    %v1477 = vpow.pop %v1476
    %v1478 = vmul.f32 %v1468, 1.442695
    %v1479 = vpow.pop %v1478
    %v1480 = vmul.f32 %v1469, 1.442695
    %v1481 = vpow.pop %v1480
    %v1482 = vmul.f32 %v1470, 1.442695
    %v1483 = vpow.pop %v1482
    %v1484 = vmul.f32 %v1471, 1.442695
    %v1485 = vpow.pop %v1484
    %v1486 = vmul.f32 %v1472, 1.442695
    %v1487 = vpow.pop %v1486
    %v1488 = vmul.f32 %v1473, 1.442695
    %v1489 = vpow.pop %v1488
    %v1490 = vsel %vm329, %v1475, 0.0
    %1491 = vadd.xlane.f32.xlu0 %v1490
    %v1492 = vpop.xlane.xlu0 %1491
    %v1493 = vsel %vm329, %v1477, 0.0
    %1494 = vadd.xlane.f32.xlu0 %v1493
    %v1495 = vpop.xlane.xlu0 %1494
    %v1496 = vsel %vm329, %v1479, 0.0
    %1497 = vadd.xlane.f32.xlu0 %v1496
    %v1498 = vpop.xlane.xlu0 %1497
    %v1499 = vsel %vm329, %v1481, 0.0
    %1500 = vadd.xlane.f32.xlu0 %v1499
    %v1501 = vpop.xlane.xlu0 %1500
    %v1502 = vsel %vm329, %v1483, 0.0
    %1503 = vadd.xlane.f32.xlu0 %v1502
    %v1504 = vpop.xlane.xlu0 %1503
    %v1505 = vsel %vm329, %v1485, 0.0
    %1506 = vadd.xlane.f32.xlu0 %v1505
    %v1507 = vpop.xlane.xlu0 %1506
    %v1508 = vsel %vm329, %v1487, 0.0
    %1509 = vadd.xlane.f32.xlu0 %v1508
    %v1510 = vpop.xlane.xlu0 %1509
    %v1511 = vsel %vm329, %v1489, 0.0
    %1512 = vadd.xlane.f32.xlu0 %v1511
    %v1513 = vpop.xlane.xlu0 %1512
    %v1514 = vrcp.pop %v1492
    %v1515 = vrcp.pop %v1495
    %v1516 = vrcp.pop %v1498
    %v1517 = vrcp.pop %v1501
    %v1518 = vrcp.pop %v1504
    %v1519 = vrcp.pop %v1507
    %v1520 = vrcp.pop %v1510
    %v1521 = vrcp.pop %v1513
    %v1522 = vmul.f32 %v1475, %v1514
    %v1523 = vmul.f32 %v1477, %v1515
    %v1524 = vmul.f32 %v1479, %v1516
    %v1525 = vmul.f32 %v1481, %v1517
    %v1526 = vmul.f32 %v1483, %v1518
    %v1527 = vmul.f32 %v1485, %v1519
    %v1528 = vmul.f32 %v1487, %v1520
    %v1529 = vmul.f32 %v1489, %v1521
    %1530 = vrot.lane.b32.xlu0 %v1267, 64
    %v1531 = vpop.permute.xlu0 %1530
    %1532 = vrot.lane.b32.xlu0 %v1272, 64
    %v1533 = vpop.permute.xlu0 %1532
    %1534 = vrot.lane.b32.xlu0 %v1278, 64
    %v1535 = vpop.permute.xlu0 %1534
    %1536 = vrot.lane.b32.xlu0 %v1280, 64
    %v1537 = vpop.permute.xlu0 %1536
    %1538 = vrot.lane.b32.xlu0 %v1282, 64
    %v1539 = vpop.permute.xlu0 %1538
    %1540 = vrot.lane.b32.xlu0 %v1284, 64
    %v1541 = vpop.permute.xlu0 %1540
    %1542 = vrot.lane.b32.xlu0 %v1286, 64
    %v1543 = vpop.permute.xlu0 %1542
    %1544 = vrot.lane.b32.xlu0 %v1288, 64
    %v1545 = vpop.permute.xlu0 %1544
    %v1555 = vsel %vm329, %v1522, 0
    %v1558 = vsel %vm329, %v1523, 0
    %v1561 = vsel %vm329, %v1524, 0
    %v1564 = vsel %vm329, %v1525, 0
    %v1567 = vsel %vm329, %v1526, 0
    %v1570 = vsel %vm329, %v1527, 0
    %v1573 = vsel %vm329, %v1528, 0
    %v1576 = vsel %vm329, %v1529, 0
    %1578 = vmatprep.subr.mxu0 0.0
    %1579 = vmatpush1.msra.mxu0 0.0
    %1580 = vmatprep.subr.mxu0 0.0
    %1581 = vmatpush1.msra.mxu0 0.0
    %1582 = vmatprep.subr.mxu0 0.0
    %1583 = vmatpush1.msra.mxu0 0.0
    %1584 = vmatprep.subr.mxu0 0.0
    %1585 = vmatpush1.msra.mxu0 0.0
    %1586 = vmatprep.subr.mxu0 0.0
    %1587 = vmatpush1.msra.mxu0 0.0
    %1588 = vmatprep.subr.mxu0 0.0
    %1589 = vmatpush1.msra.mxu0 0.0
    %1590 = vmatprep.subr.mxu0 0.0
    %1591 = vmatpush1.msra.mxu0 0.0
    %1592 = vmatprep.subr.mxu0 0.0
    %1593 = vmatpush1.msra.mxu0 0.0
    %1594 = vmatprep.subr.mxu0 0.0
    %1595 = vmatpush1.msra.mxu0 %v1545
    %1596 = vmatprep.subr.mxu0 0.0
    %1597 = vmatpush1.msra.mxu0 %v1543
    %1598 = vmatprep.subr.mxu0 0.0
    %1599 = vmatpush1.msra.mxu0 %v1541
    %1600 = vmatprep.subr.mxu0 0.0
    %1601 = vmatpush1.msra.mxu0 %v1539
    %1602 = vmatprep.subr.mxu0 0.0
    %1603 = vmatpush1.msra.mxu0 %v1537
    %1604 = vmatprep.subr.mxu0 0.0
    %1605 = vmatpush1.msra.mxu0 %v1535
    %1606 = vmatprep.subr.mxu0 0.0
    %1607 = vmatpush1.msra.mxu0 %v1533
    %1608 = vmatprep.subr.mxu0 0.0
    %1609 = vmatpush1.msra.mxu0 %v1531
    %1610 = vmatprep.subr.mxu0 0.0
    %1611 = vmatpush2.msra.mxu0 0.0
    %1612 = vmatprep.subr.mxu0 0.0
    %1613 = vmatpush2.msra.mxu0 0.0
    %1614 = vmatprep.subr.mxu0 0.0
    %1615 = vmatpush2.msra.mxu0 0.0
    %1616 = vmatprep.subr.mxu0 0.0
    %1617 = vmatpush2.msra.mxu0 0.0
    %1618 = vmatprep.subr.mxu0 0.0
    %1619 = vmatpush2.msra.mxu0 0.0
    %1620 = vmatprep.subr.mxu0 0.0
    %1621 = vmatpush2.msra.mxu0 0.0
    %1622 = vmatprep.subr.mxu0 0.0
    %1623 = vmatpush2.msra.mxu0 0.0
    %1624 = vmatprep.subr.mxu0 0.0
    %1625 = vmatpush2.msra.mxu0 0.0
    %1626 = vmatprep.subr.mxu0 0.0
    %1627 = vmatpush2.msra.mxu0 0.0
    %1628 = vmatprep.subr.mxu0 0.0
    %1629 = vmatpush2.msra.mxu0 0.0
    %1630 = vmatprep.subr.mxu0 0.0
    %1631 = vmatpush2.msra.mxu0 0.0
    %1632 = vmatprep.subr.mxu0 0.0
    %1633 = vmatpush2.msra.mxu0 0.0
    %1634 = vmatprep.subr.mxu0 0.0
    %1635 = vmatpush2.msra.mxu0 0.0
    %1636 = vmatprep.subr.mxu0 0.0
    %1637 = vmatpush2.msra.mxu0 0.0
    %1638 = vmatprep.subr.mxu0 0.0
    %1639 = vmatpush2.msra.mxu0 0.0
    %1640 = vmatprep.subr.mxu0 0.0
    %1641 = vmatpush2.msra.mxu0 0.0
    %1642 = vmatprep.mubr.f32.mxu0 0.0
    %1643 = vmatmul.mubr.f32.gmra.mxu0 %v1555
    %v1644 = vpop.f32.mrf.mxu0
    %v1645 = vadd.f32 0.0, %v1644
    %v1646 = vpop.f32.mrf.mxu0
    %1647 = vmatprep.mubr.f32.mxu0 0.0
    %1648 = vmatmul.mubr.f32.gmra.mxu0 %v1558
    %v1649 = vpop.f32.mrf.mxu0
    %v1650 = vadd.f32 0.0, %v1649
    %v1651 = vpop.f32.mrf.mxu0
    %1652 = vmatprep.mubr.f32.mxu0 0.0
    %1653 = vmatmul.mubr.f32.gmra.mxu0 %v1561
    %v1654 = vpop.f32.mrf.mxu0
    %v1655 = vadd.f32 0.0, %v1654
    %v1656 = vpop.f32.mrf.mxu0
    %1657 = vmatprep.mubr.f32.mxu0 0.0
    %1658 = vmatmul.mubr.f32.gmra.mxu0 %v1564
    %v1659 = vpop.f32.mrf.mxu0
    %v1660 = vadd.f32 0.0, %v1659
    %v1661 = vpop.f32.mrf.mxu0
    %1662 = vmatprep.mubr.f32.mxu0 0.0
    %1663 = vmatmul.mubr.f32.gmra.mxu0 %v1567
    %v1664 = vpop.f32.mrf.mxu0
    %v1665 = vadd.f32 0.0, %v1664
    %v1666 = vpop.f32.mrf.mxu0
    %1667 = vmatprep.mubr.f32.mxu0 0.0
    %1668 = vmatmul.mubr.f32.gmra.mxu0 %v1570
    %v1669 = vpop.f32.mrf.mxu0
    %v1670 = vadd.f32 0.0, %v1669
    %v1671 = vpop.f32.mrf.mxu0
    %1672 = vmatprep.mubr.f32.mxu0 0.0
    %1673 = vmatmul.mubr.f32.gmra.mxu0 %v1573
    %v1674 = vpop.f32.mrf.mxu0
    %v1675 = vadd.f32 0.0, %v1674
    %v1676 = vpop.f32.mrf.mxu0
    %1677 = vmatprep.mubr.f32.mxu0 0.0
    %1678 = vmatmul.mubr.f32.gmra.mxu0 %v1576
    %v1679 = vpop.f32.mrf.mxu0
    %v1680 = vadd.f32 0.0, %v1679
    %v1681 = vpop.f32.mrf.mxu0
    %1682 = vdwg.mxu0
    %v1683 = vld [vmem:[%s1184 + $0x20] sm:$0xff]
    %v1684 = vld [vmem:[%s1184 + $0x28] sm:$0xff]
    %v1685 = vld [vmem:[%s1184 + $0x30] sm:$0xff]
    %v1686 = vld [vmem:[%s1184 + $0x38] sm:$0xff]
    %v1688 = vsel %vm191, %v1645, 0
    %v1691 = vsel %vm191, %v1650, 0
    %1693 = vmatprep.subr.mxu0 0.0
    %1694 = vmatpush1.msra.mxu0 0.0
    %1695 = vmatprep.subr.mxu0 0.0
    %1696 = vmatpush1.msra.mxu0 0.0
    %1697 = vmatprep.subr.mxu0 0.0
    %1698 = vmatpush1.msra.mxu0 0.0
    %1699 = vmatprep.subr.mxu0 0.0
    %1700 = vmatpush1.msra.mxu0 0.0
    %1701 = vmatprep.subr.mxu0 0.0
    %1702 = vmatpush1.msra.mxu0 0.0
    %1703 = vmatprep.subr.mxu0 0.0
    %1704 = vmatpush1.msra.mxu0 0.0
    %1705 = vmatprep.subr.mxu0 0.0
    %1706 = vmatpush1.msra.mxu0 0.0
    %1707 = vmatprep.subr.mxu0 0.0
    %1708 = vmatpush1.msra.mxu0 0.0
    %1709 = vmatprep.subr.mxu0 0.0
    %1710 = vmatpush1.msra.mxu0 0.0
    %1711 = vmatprep.subr.mxu0 0.0
    %1712 = vmatpush1.msra.mxu0 0.0
    %1713 = vmatprep.subr.mxu0 0.0
    %1714 = vmatpush1.msra.mxu0 0.0
    %1715 = vmatprep.subr.mxu0 0.0
    %1716 = vmatpush1.msra.mxu0 0.0
    %1717 = vmatprep.subr.mxu0 0.0
    %1718 = vmatpush1.msra.mxu0 0.0
    %1719 = vmatprep.subr.mxu0 0.0
    %1720 = vmatpush1.msra.mxu0 0.0
    %1721 = vmatprep.subr.mxu0 0.0
    %1722 = vmatpush1.msra.mxu0 0.0
    %1723 = vmatprep.subr.mxu0 0.0
    %1724 = vmatpush1.msra.mxu0 %v1683
    %1725 = vmatprep.subr.mxu0 0.0
    %1726 = vmatpush2.msra.mxu0 0.0
    %1727 = vmatprep.subr.mxu0 0.0
    %1728 = vmatpush2.msra.mxu0 0.0
    %1729 = vmatprep.subr.mxu0 0.0
    %1730 = vmatpush2.msra.mxu0 0.0
    %1731 = vmatprep.subr.mxu0 0.0
    %1732 = vmatpush2.msra.mxu0 0.0
    %1733 = vmatprep.subr.mxu0 0.0
    %1734 = vmatpush2.msra.mxu0 0.0
    %1735 = vmatprep.subr.mxu0 0.0
    %1736 = vmatpush2.msra.mxu0 0.0
    %1737 = vmatprep.subr.mxu0 0.0
    %1738 = vmatpush2.msra.mxu0 0.0
    %1739 = vmatprep.subr.mxu0 0.0
    %1740 = vmatpush2.msra.mxu0 0.0
    %1741 = vmatprep.subr.mxu0 0.0
    %1742 = vmatpush2.msra.mxu0 0.0
    %1743 = vmatprep.subr.mxu0 0.0
    %1744 = vmatpush2.msra.mxu0 0.0
    %1745 = vmatprep.subr.mxu0 0.0
    %1746 = vmatpush2.msra.mxu0 0.0
    %1747 = vmatprep.subr.mxu0 0.0
    %1748 = vmatpush2.msra.mxu0 0.0
    %1749 = vmatprep.subr.mxu0 0.0
    %1750 = vmatpush2.msra.mxu0 0.0
    %1751 = vmatprep.subr.mxu0 0.0
    %1752 = vmatpush2.msra.mxu0 0.0
    %1753 = vmatprep.subr.mxu0 0.0
    %1754 = vmatpush2.msra.mxu0 0.0
    %1755 = vmatprep.subr.mxu0 0.0
    %1756 = vmatpush2.msra.mxu0 0.0
    %1757 = vmatprep.mubr.f32.mxu0 0.0
    %1758 = vmatmul.mubr.f32.gmra.mxu0 %v1688
    %v1759 = vpop.f32.mrf.mxu0
    %v1760 = vadd.f32 0.0, %v1759
    %v1761 = vpop.f32.mrf.mxu0
    %1762 = vmatprep.mubr.f32.mxu0 0.0
    %1763 = vmatmul.mubr.f32.gmra.mxu0 %v1691
    %v1764 = vpop.f32.mrf.mxu0
    %v1765 = vadd.f32 0.0, %v1764
    %v1766 = vpop.f32.mrf.mxu0
    %1767 = vdwg.mxu0
    %v1769 = vsel %vm191, %v1655, 0
    %v1772 = vsel %vm191, %v1660, 0
    %1774 = vmatprep.subr.mxu0 0.0
    %1775 = vmatpush1.msra.mxu0 0.0
    %1776 = vmatprep.subr.mxu0 0.0
    %1777 = vmatpush1.msra.mxu0 0.0
    %1778 = vmatprep.subr.mxu0 0.0
    %1779 = vmatpush1.msra.mxu0 0.0
    %1780 = vmatprep.subr.mxu0 0.0
    %1781 = vmatpush1.msra.mxu0 0.0
    %1782 = vmatprep.subr.mxu0 0.0
    %1783 = vmatpush1.msra.mxu0 0.0
    %1784 = vmatprep.subr.mxu0 0.0
    %1785 = vmatpush1.msra.mxu0 0.0
    %1786 = vmatprep.subr.mxu0 0.0
    %1787 = vmatpush1.msra.mxu0 0.0
    %1788 = vmatprep.subr.mxu0 0.0
    %1789 = vmatpush1.msra.mxu0 0.0
    %1790 = vmatprep.subr.mxu0 0.0
    %1791 = vmatpush1.msra.mxu0 0.0
    %1792 = vmatprep.subr.mxu0 0.0
    %1793 = vmatpush1.msra.mxu0 0.0
    %1794 = vmatprep.subr.mxu0 0.0
    %1795 = vmatpush1.msra.mxu0 0.0
    %1796 = vmatprep.subr.mxu0 0.0
    %1797 = vmatpush1.msra.mxu0 0.0
    %1798 = vmatprep.subr.mxu0 0.0
    %1799 = vmatpush1.msra.mxu0 0.0
    %1800 = vmatprep.subr.mxu0 0.0
    %1801 = vmatpush1.msra.mxu0 0.0
    %1802 = vmatprep.subr.mxu0 0.0
    %1803 = vmatpush1.msra.mxu0 0.0
    %1804 = vmatprep.subr.mxu0 0.0
    %1805 = vmatpush1.msra.mxu0 %v1684
    %1806 = vmatprep.subr.mxu0 0.0
    %1807 = vmatpush2.msra.mxu0 0.0
    %1808 = vmatprep.subr.mxu0 0.0
    %1809 = vmatpush2.msra.mxu0 0.0
    %1810 = vmatprep.subr.mxu0 0.0
    %1811 = vmatpush2.msra.mxu0 0.0
    %1812 = vmatprep.subr.mxu0 0.0
    %1813 = vmatpush2.msra.mxu0 0.0
    %1814 = vmatprep.subr.mxu0 0.0
    %1815 = vmatpush2.msra.mxu0 0.0
    %1816 = vmatprep.subr.mxu0 0.0
    %1817 = vmatpush2.msra.mxu0 0.0
    %1818 = vmatprep.subr.mxu0 0.0
    %1819 = vmatpush2.msra.mxu0 0.0
    %1820 = vmatprep.subr.mxu0 0.0
    %1821 = vmatpush2.msra.mxu0 0.0
    %1822 = vmatprep.subr.mxu0 0.0
    %1823 = vmatpush2.msra.mxu0 0.0
    %1824 = vmatprep.subr.mxu0 0.0
    %1825 = vmatpush2.msra.mxu0 0.0
    %1826 = vmatprep.subr.mxu0 0.0
    %1827 = vmatpush2.msra.mxu0 0.0
    %1828 = vmatprep.subr.mxu0 0.0
    %1829 = vmatpush2.msra.mxu0 0.0
    %1830 = vmatprep.subr.mxu0 0.0
    %1831 = vmatpush2.msra.mxu0 0.0
    %1832 = vmatprep.subr.mxu0 0.0
    %1833 = vmatpush2.msra.mxu0 0.0
    %1834 = vmatprep.subr.mxu0 0.0
    %1835 = vmatpush2.msra.mxu0 0.0
    %1836 = vmatprep.subr.mxu0 0.0
    %1837 = vmatpush2.msra.mxu0 0.0
    %1838 = vmatprep.mubr.f32.mxu0 0.0
    %1839 = vmatmul.mubr.f32.gmra.mxu0 %v1769
    %v1840 = vpop.f32.mrf.mxu0
    %v1841 = vadd.f32 0.0, %v1840
    %v1842 = vpop.f32.mrf.mxu0
    %1843 = vmatprep.mubr.f32.mxu0 0.0
    %1844 = vmatmul.mubr.f32.gmra.mxu0 %v1772
    %v1845 = vpop.f32.mrf.mxu0
    %v1846 = vadd.f32 0.0, %v1845
    %v1847 = vpop.f32.mrf.mxu0
    %1848 = vdwg.mxu0
    %v1850 = vsel %vm191, %v1665, 0
    %v1853 = vsel %vm191, %v1670, 0
    %1855 = vmatprep.subr.mxu0 0.0
    %1856 = vmatpush1.msra.mxu0 0.0
    %1857 = vmatprep.subr.mxu0 0.0
    %1858 = vmatpush1.msra.mxu0 0.0
    %1859 = vmatprep.subr.mxu0 0.0
    %1860 = vmatpush1.msra.mxu0 0.0
    %1861 = vmatprep.subr.mxu0 0.0
    %1862 = vmatpush1.msra.mxu0 0.0
    %1863 = vmatprep.subr.mxu0 0.0
    %1864 = vmatpush1.msra.mxu0 0.0
    %1865 = vmatprep.subr.mxu0 0.0
    %1866 = vmatpush1.msra.mxu0 0.0
    %1867 = vmatprep.subr.mxu0 0.0
    %1868 = vmatpush1.msra.mxu0 0.0
    %1869 = vmatprep.subr.mxu0 0.0
    %1870 = vmatpush1.msra.mxu0 0.0
    %1871 = vmatprep.subr.mxu0 0.0
    %1872 = vmatpush1.msra.mxu0 0.0
    %1873 = vmatprep.subr.mxu0 0.0
    %1874 = vmatpush1.msra.mxu0 0.0
    %1875 = vmatprep.subr.mxu0 0.0
    %1876 = vmatpush1.msra.mxu0 0.0
    %1877 = vmatprep.subr.mxu0 0.0
    %1878 = vmatpush1.msra.mxu0 0.0
    %1879 = vmatprep.subr.mxu0 0.0
    %1880 = vmatpush1.msra.mxu0 0.0
    %1881 = vmatprep.subr.mxu0 0.0
    %1882 = vmatpush1.msra.mxu0 0.0
    %1883 = vmatprep.subr.mxu0 0.0
    %1884 = vmatpush1.msra.mxu0 0.0
    %1885 = vmatprep.subr.mxu0 0.0
    %1886 = vmatpush1.msra.mxu0 %v1685
    %1887 = vmatprep.subr.mxu0 0.0
    %1888 = vmatpush2.msra.mxu0 0.0
    %1889 = vmatprep.subr.mxu0 0.0
    %1890 = vmatpush2.msra.mxu0 0.0
    %1891 = vmatprep.subr.mxu0 0.0
    %1892 = vmatpush2.msra.mxu0 0.0
    %1893 = vmatprep.subr.mxu0 0.0
    %1894 = vmatpush2.msra.mxu0 0.0
    %1895 = vmatprep.subr.mxu0 0.0
    %1896 = vmatpush2.msra.mxu0 0.0
    %1897 = vmatprep.subr.mxu0 0.0
    %1898 = vmatpush2.msra.mxu0 0.0
    %1899 = vmatprep.subr.mxu0 0.0
    %1900 = vmatpush2.msra.mxu0 0.0
    %1901 = vmatprep.subr.mxu0 0.0
    %1902 = vmatpush2.msra.mxu0 0.0
    %1903 = vmatprep.subr.mxu0 0.0
    %1904 = vmatpush2.msra.mxu0 0.0
    %1905 = vmatprep.subr.mxu0 0.0
    %1906 = vmatpush2.msra.mxu0 0.0
    %1907 = vmatprep.subr.mxu0 0.0
    %1908 = vmatpush2.msra.mxu0 0.0
    %1909 = vmatprep.subr.mxu0 0.0
    %1910 = vmatpush2.msra.mxu0 0.0
    %1911 = vmatprep.subr.mxu0 0.0
    %1912 = vmatpush2.msra.mxu0 0.0
    %1913 = vmatprep.subr.mxu0 0.0
    %1914 = vmatpush2.msra.mxu0 0.0
    %1915 = vmatprep.subr.mxu0 0.0
    %1916 = vmatpush2.msra.mxu0 0.0
    %1917 = vmatprep.subr.mxu0 0.0
    %1918 = vmatpush2.msra.mxu0 0.0
    %1919 = vmatprep.mubr.f32.mxu0 0.0
    %1920 = vmatmul.mubr.f32.gmra.mxu0 %v1850
    %v1921 = vpop.f32.mrf.mxu0
    %v1922 = vadd.f32 0.0, %v1921
    %v1923 = vpop.f32.mrf.mxu0
    %1924 = vmatprep.mubr.f32.mxu0 0.0
    %1925 = vmatmul.mubr.f32.gmra.mxu0 %v1853
    %v1926 = vpop.f32.mrf.mxu0
    %v1927 = vadd.f32 0.0, %v1926
    %v1928 = vpop.f32.mrf.mxu0
    %1929 = vdwg.mxu0
    %v1931 = vsel %vm191, %v1675, 0
    %v1934 = vsel %vm191, %v1680, 0
    %1936 = vmatprep.subr.mxu0 0.0
    %1937 = vmatpush1.msra.mxu0 0.0
    %1938 = vmatprep.subr.mxu0 0.0
    %1939 = vmatpush1.msra.mxu0 0.0
    %1940 = vmatprep.subr.mxu0 0.0
    %1941 = vmatpush1.msra.mxu0 0.0
    %1942 = vmatprep.subr.mxu0 0.0
    %1943 = vmatpush1.msra.mxu0 0.0
    %1944 = vmatprep.subr.mxu0 0.0
    %1945 = vmatpush1.msra.mxu0 0.0
    %1946 = vmatprep.subr.mxu0 0.0
    %1947 = vmatpush1.msra.mxu0 0.0
    %1948 = vmatprep.subr.mxu0 0.0
    %1949 = vmatpush1.msra.mxu0 0.0
    %1950 = vmatprep.subr.mxu0 0.0
    %1951 = vmatpush1.msra.mxu0 0.0
    %1952 = vmatprep.subr.mxu0 0.0
    %1953 = vmatpush1.msra.mxu0 0.0
    %1954 = vmatprep.subr.mxu0 0.0
    %1955 = vmatpush1.msra.mxu0 0.0
    %1956 = vmatprep.subr.mxu0 0.0
    %1957 = vmatpush1.msra.mxu0 0.0
    %1958 = vmatprep.subr.mxu0 0.0
    %1959 = vmatpush1.msra.mxu0 0.0
    %1960 = vmatprep.subr.mxu0 0.0
    %1961 = vmatpush1.msra.mxu0 0.0
    %1962 = vmatprep.subr.mxu0 0.0
    %1963 = vmatpush1.msra.mxu0 0.0
    %1964 = vmatprep.subr.mxu0 0.0
    %1965 = vmatpush1.msra.mxu0 0.0
    %1966 = vmatprep.subr.mxu0 0.0
    %1967 = vmatpush1.msra.mxu0 %v1686
    %1968 = vmatprep.subr.mxu0 0.0
    %1969 = vmatpush2.msra.mxu0 0.0
    %1970 = vmatprep.subr.mxu0 0.0
    %1971 = vmatpush2.msra.mxu0 0.0
    %1972 = vmatprep.subr.mxu0 0.0
    %1973 = vmatpush2.msra.mxu0 0.0
    %1974 = vmatprep.subr.mxu0 0.0
    %1975 = vmatpush2.msra.mxu0 0.0
    %1976 = vmatprep.subr.mxu0 0.0
    %1977 = vmatpush2.msra.mxu0 0.0
    %1978 = vmatprep.subr.mxu0 0.0
    %1979 = vmatpush2.msra.mxu0 0.0
    %1980 = vmatprep.subr.mxu0 0.0
    %1981 = vmatpush2.msra.mxu0 0.0
    %1982 = vmatprep.subr.mxu0 0.0
    %1983 = vmatpush2.msra.mxu0 0.0
    %1984 = vmatprep.subr.mxu0 0.0
    %1985 = vmatpush2.msra.mxu0 0.0
    %1986 = vmatprep.subr.mxu0 0.0
    %1987 = vmatpush2.msra.mxu0 0.0
    %1988 = vmatprep.subr.mxu0 0.0
    %1989 = vmatpush2.msra.mxu0 0.0
    %1990 = vmatprep.subr.mxu0 0.0
    %1991 = vmatpush2.msra.mxu0 0.0
    %1992 = vmatprep.subr.mxu0 0.0
    %1993 = vmatpush2.msra.mxu0 0.0
    %1994 = vmatprep.subr.mxu0 0.0
    %1995 = vmatpush2.msra.mxu0 0.0
    %1996 = vmatprep.subr.mxu0 0.0
    %1997 = vmatpush2.msra.mxu0 0.0
    %1998 = vmatprep.subr.mxu0 0.0
    %1999 = vmatpush2.msra.mxu0 0.0
    %2000 = vmatprep.mubr.f32.mxu0 0.0
    %2001 = vmatmul.mubr.f32.gmra.mxu0 %v1931
    %v2002 = vpop.f32.mrf.mxu0
    %v2003 = vadd.f32 0.0, %v2002
    %v2004 = vpop.f32.mrf.mxu0
    %2005 = vmatprep.mubr.f32.mxu0 0.0
    %2006 = vmatmul.mubr.f32.gmra.mxu0 %v1934
    %v2007 = vpop.f32.mrf.mxu0
    %v2008 = vadd.f32 0.0, %v2007
    %v2009 = vpop.f32.mrf.mxu0
    %2010 = vdwg.mxu0
    %v2011 = vadd.f32 %v1760, %v1841
    %v2012 = vadd.f32 %v2011, %v1922
    %v2013 = vadd.f32 %v2012, %v2003
    %v2014 = vadd.f32 %v1765, %v1846
    %v2015 = vadd.f32 %v2014, %v1927
    %v2016 = vadd.f32 %v2015, %v2008
    %v2017 = vld [vmem:[%s1184 + $0xe1] sm:$0x1]
    %v2018 = vlaneseq
    %v2019 = vshrl.u32 %v2018, 7
    %v2020 = vsub.s32 0, %v2019
    %v2021 = vrot.slane %v2017, %v2020
    %v2022 = vadd.f32 %v2013, %v2021
    %v2023 = vadd.f32 %v2016, %v2021
    %v2024 = vadd.f32 %v1182, %v2022
    %v2025 = vadd.f32 %v1183, %v2023
    %v2026 = vld [vmem:[%s1184 + $0xe4] sm:$0x1]
    %v2027 = vld [vmem:[%s1184 + $0xe5] sm:$0x1]
    %v2028 = vsel %vm79, %v2024, 0.0
    %2029 = vadd.xlane.f32.xlu0 %v2028
    %v2030 = vpop.xlane.xlu0 %2029
    %v2031 = vsel %vm79, %v2025, 0.0
    %2032 = vadd.xlane.f32.xlu0 %v2031
    %v2033 = vpop.xlane.xlu0 %2032
    %v2034 = vmul.f32 %v2030, 0.03125
    %v2035 = vmul.f32 %v2033, 0.03125
    %v2036 = vsub.f32 %v2024, %v2034
    %v2037 = vsub.f32 %v2025, %v2035
    %v2038 = vmul.f32 %v2036, %v2036
    %v2039 = vmul.f32 %v2037, %v2037
    %v2040 = vsel %vm79, %v2038, 0.0
    %2041 = vadd.xlane.f32.xlu0 %v2040
    %v2042 = vpop.xlane.xlu0 %2041
    %v2043 = vsel %vm79, %v2039, 0.0
    %2044 = vadd.xlane.f32.xlu0 %v2043
    %v2045 = vpop.xlane.xlu0 %2044
    %v2046 = vmul.f32 %v2042, 0.03125
    %v2047 = vmul.f32 %v2045, 0.03125
    %v2048 = vadd.f32 %v2046, 1e-05
    %v2049 = vadd.f32 %v2047, 1e-05
    %v2050 = vrsqrt.pop %v2048
    %v2051 = vrsqrt.pop %v2049
    %v2052 = vmul.f32 %v2036, %v2050
    %v2053 = vmul.f32 %v2037, %v2051
    %v2054 = vlaneseq
    %v2055 = vshrl.u32 %v2054, 7
    %v2056 = vsub.s32 0, %v2055
    %v2057 = vrot.slane %v2026, %v2056
    %v2058 = vmul.f32 %v2052, %v2057
    %v2059 = vmul.f32 %v2053, %v2057
    %v2060 = vlaneseq
    %v2061 = vshrl.u32 %v2060, 7
    %v2062 = vsub.s32 0, %v2061
    %v2063 = vrot.slane %v2027, %v2062
    %v2064 = vadd.f32 %v2058, %v2063
    %v2065 = vadd.f32 %v2059, %v2063
    %v2066 = vld [vmem:[%s1184 + $0x40] sm:$0xff]
    %v2067 = vld [vmem:[%s1184 + $0x48] sm:$0xff]
    %v2068 = vld [vmem:[%s1184 + $0x50] sm:$0xff]
    %v2069 = vld [vmem:[%s1184 + $0x58] sm:$0xff]
    %v2070 = vld [vmem:[%s1184 + $0xe2] sm:$0x1]
    %v2071 = vlaneseq
    %v2072 = vshrl.u32 %v2071, 7
    %v2073 = vsub.s32 0, %v2072
    %v2074 = vrot.slane %v2070, %v2073
    %v2076 = vsel %vm79, %v2064, 0
    %v2079 = vsel %vm79, %v2065, 0
    %2081 = vmatprep.subr.mxu0 0.0
    %2082 = vmatpush1.msra.mxu0 0.0
    %2083 = vmatprep.subr.mxu0 0.0
    %2084 = vmatpush1.msra.mxu0 0.0
    %2085 = vmatprep.subr.mxu0 0.0
    %2086 = vmatpush1.msra.mxu0 0.0
    %2087 = vmatprep.subr.mxu0 0.0
    %2088 = vmatpush1.msra.mxu0 0.0
    %2089 = vmatprep.subr.mxu0 0.0
    %2090 = vmatpush1.msra.mxu0 0.0
    %2091 = vmatprep.subr.mxu0 0.0
    %2092 = vmatpush1.msra.mxu0 0.0
    %2093 = vmatprep.subr.mxu0 0.0
    %2094 = vmatpush1.msra.mxu0 0.0
    %2095 = vmatprep.subr.mxu0 0.0
    %2096 = vmatpush1.msra.mxu0 0.0
    %2097 = vmatprep.subr.mxu0 0.0
    %2098 = vmatpush1.msra.mxu0 0.0
    %2099 = vmatprep.subr.mxu0 0.0
    %2100 = vmatpush1.msra.mxu0 0.0
    %2101 = vmatprep.subr.mxu0 0.0
    %2102 = vmatpush1.msra.mxu0 0.0
    %2103 = vmatprep.subr.mxu0 0.0
    %2104 = vmatpush1.msra.mxu0 0.0
    %2105 = vmatprep.subr.mxu0 0.0
    %2106 = vmatpush1.msra.mxu0 %v2069
    %2107 = vmatprep.subr.mxu0 0.0
    %2108 = vmatpush1.msra.mxu0 %v2068
    %2109 = vmatprep.subr.mxu0 0.0
    %2110 = vmatpush1.msra.mxu0 %v2067
    %2111 = vmatprep.subr.mxu0 0.0
    %2112 = vmatpush1.msra.mxu0 %v2066
    %2113 = vmatprep.subr.mxu0 0.0
    %2114 = vmatpush2.msra.mxu0 0.0
    %2115 = vmatprep.subr.mxu0 0.0
    %2116 = vmatpush2.msra.mxu0 0.0
    %2117 = vmatprep.subr.mxu0 0.0
    %2118 = vmatpush2.msra.mxu0 0.0
    %2119 = vmatprep.subr.mxu0 0.0
    %2120 = vmatpush2.msra.mxu0 0.0
    %2121 = vmatprep.subr.mxu0 0.0
    %2122 = vmatpush2.msra.mxu0 0.0
    %2123 = vmatprep.subr.mxu0 0.0
    %2124 = vmatpush2.msra.mxu0 0.0
    %2125 = vmatprep.subr.mxu0 0.0
    %2126 = vmatpush2.msra.mxu0 0.0
    %2127 = vmatprep.subr.mxu0 0.0
    %2128 = vmatpush2.msra.mxu0 0.0
    %2129 = vmatprep.subr.mxu0 0.0
    %2130 = vmatpush2.msra.mxu0 0.0
    %2131 = vmatprep.subr.mxu0 0.0
    %2132 = vmatpush2.msra.mxu0 0.0
    %2133 = vmatprep.subr.mxu0 0.0
    %2134 = vmatpush2.msra.mxu0 0.0
    %2135 = vmatprep.subr.mxu0 0.0
    %2136 = vmatpush2.msra.mxu0 0.0
    %2137 = vmatprep.subr.mxu0 0.0
    %2138 = vmatpush2.msra.mxu0 0.0
    %2139 = vmatprep.subr.mxu0 0.0
    %2140 = vmatpush2.msra.mxu0 0.0
    %2141 = vmatprep.subr.mxu0 0.0
    %2142 = vmatpush2.msra.mxu0 0.0
    %2143 = vmatprep.subr.mxu0 0.0
    %2144 = vmatpush2.msra.mxu0 0.0
    %2145 = vmatprep.mubr.f32.mxu0 0.0
    %2146 = vmatmul.mubr.f32.gmra.mxu0 %v2076
    %v2147 = vpop.f32.mrf.mxu0
    %v2148 = vadd.f32 %v2074, %v2147
    %v2149 = vpop.f32.mrf.mxu0
    %2150 = vmatprep.mubr.f32.mxu0 0.0
    %2151 = vmatmul.mubr.f32.gmra.mxu0 %v2079
    %v2152 = vpop.f32.mrf.mxu0
    %v2153 = vadd.f32 %v2074, %v2152
    %v2154 = vpop.f32.mrf.mxu0
    %2155 = vdwg.mxu0
    %v2156 = vmax.f32 %v2148, 0.0
    %v2157 = vmax.f32 %v2153, 0.0
    %v2158 = vld [vmem:[%s1184 + $0x60] sm:$0xff]
    %v2159 = vld [vmem:[%s1184 + $0x68] sm:$0xff]
    %v2160 = vld [vmem:[%s1184 + $0x70] sm:$0xff]
    %v2161 = vld [vmem:[%s1184 + $0x78] sm:$0xff]
    %v2162 = vld [vmem:[%s1184 + $0x80] sm:$0xff]
    %v2163 = vld [vmem:[%s1184 + $0x88] sm:$0xff]
    %v2164 = vld [vmem:[%s1184 + $0x90] sm:$0xff]
    %v2165 = vld [vmem:[%s1184 + $0x98] sm:$0xff]
    %v2166 = vld [vmem:[%s1184 + $0xa0] sm:$0xff]
    %v2167 = vld [vmem:[%s1184 + $0xa8] sm:$0xff]
    %v2168 = vld [vmem:[%s1184 + $0xb0] sm:$0xff]
    %v2169 = vld [vmem:[%s1184 + $0xb8] sm:$0xff]
    %v2170 = vld [vmem:[%s1184 + $0xc0] sm:$0xff]
    %v2171 = vld [vmem:[%s1184 + $0xc8] sm:$0xff]
    %v2172 = vld [vmem:[%s1184 + $0xd0] sm:$0xff]
    %v2173 = vld [vmem:[%s1184 + $0xd8] sm:$0xff]
    %v2174 = vld [vmem:[%s1184 + $0xe3] sm:$0x1]
    %v2175 = vlaneseq
    %v2176 = vshrl.u32 %v2175, 7
    %v2177 = vsub.s32 0, %v2176
    %v2178 = vrot.slane %v2174, %v2177
    %2179 = vmatprep.subr.mxu0 0.0
    %2180 = vmatpush1.msra.mxu0 %v2173
    %2181 = vmatprep.subr.mxu0 0.0
    %2182 = vmatpush1.msra.mxu0 %v2172
    %2183 = vmatprep.subr.mxu0 0.0
    %2184 = vmatpush1.msra.mxu0 %v2171
    %2185 = vmatprep.subr.mxu0 0.0
    %2186 = vmatpush1.msra.mxu0 %v2170
    %2187 = vmatprep.subr.mxu0 0.0
    %2188 = vmatpush1.msra.mxu0 %v2169
    %2189 = vmatprep.subr.mxu0 0.0
    %2190 = vmatpush1.msra.mxu0 %v2168
    %2191 = vmatprep.subr.mxu0 0.0
    %2192 = vmatpush1.msra.mxu0 %v2167
    %2193 = vmatprep.subr.mxu0 0.0
    %2194 = vmatpush1.msra.mxu0 %v2166
    %2195 = vmatprep.subr.mxu0 0.0
    %2196 = vmatpush1.msra.mxu0 %v2165
    %2197 = vmatprep.subr.mxu0 0.0
    %2198 = vmatpush1.msra.mxu0 %v2164
    %2199 = vmatprep.subr.mxu0 0.0
    %2200 = vmatpush1.msra.mxu0 %v2163
    %2201 = vmatprep.subr.mxu0 0.0
    %2202 = vmatpush1.msra.mxu0 %v2162
    %2203 = vmatprep.subr.mxu0 0.0
    %2204 = vmatpush1.msra.mxu0 %v2161
    %2205 = vmatprep.subr.mxu0 0.0
    %2206 = vmatpush1.msra.mxu0 %v2160
    %2207 = vmatprep.subr.mxu0 0.0
    %2208 = vmatpush1.msra.mxu0 %v2159
    %2209 = vmatprep.subr.mxu0 0.0
    %2210 = vmatpush1.msra.mxu0 %v2158
    %2211 = vmatprep.subr.mxu0 0.0
    %2212 = vmatpush2.msra.mxu0 0.0
    %2213 = vmatprep.subr.mxu0 0.0
    %2214 = vmatpush2.msra.mxu0 0.0
    %2215 = vmatprep.subr.mxu0 0.0
    %2216 = vmatpush2.msra.mxu0 0.0
    %2217 = vmatprep.subr.mxu0 0.0
    %2218 = vmatpush2.msra.mxu0 0.0
    %2219 = vmatprep.subr.mxu0 0.0
    %2220 = vmatpush2.msra.mxu0 0.0
    %2221 = vmatprep.subr.mxu0 0.0
    %2222 = vmatpush2.msra.mxu0 0.0
    %2223 = vmatprep.subr.mxu0 0.0
    %2224 = vmatpush2.msra.mxu0 0.0
    %2225 = vmatprep.subr.mxu0 0.0
    %2226 = vmatpush2.msra.mxu0 0.0
    %2227 = vmatprep.subr.mxu0 0.0
    %2228 = vmatpush2.msra.mxu0 0.0
    %2229 = vmatprep.subr.mxu0 0.0
    %2230 = vmatpush2.msra.mxu0 0.0
    %2231 = vmatprep.subr.mxu0 0.0
    %2232 = vmatpush2.msra.mxu0 0.0
    %2233 = vmatprep.subr.mxu0 0.0
    %2234 = vmatpush2.msra.mxu0 0.0
    %2235 = vmatprep.subr.mxu0 0.0
    %2236 = vmatpush2.msra.mxu0 0.0
    %2237 = vmatprep.subr.mxu0 0.0
    %2238 = vmatpush2.msra.mxu0 0.0
    %2239 = vmatprep.subr.mxu0 0.0
    %2240 = vmatpush2.msra.mxu0 0.0
    %2241 = vmatprep.subr.mxu0 0.0
    %2242 = vmatpush2.msra.mxu0 0.0
    %2243 = vmatprep.mubr.f32.mxu0 0.0
    %2244 = vmatmul.mubr.f32.gmra.mxu0 %v2156
    %v2245 = vpop.f32.mrf.mxu0
    %v2246 = vadd.f32 %v2178, %v2245
    %v2247 = vpop.f32.mrf.mxu0
    %2248 = vmatprep.mubr.f32.mxu0 0.0
    %2249 = vmatmul.mubr.f32.gmra.mxu0 %v2157
    %v2250 = vpop.f32.mrf.mxu0
    %v2251 = vadd.f32 %v2178, %v2250
    %v2252 = vpop.f32.mrf.mxu0
    %2253 = vdwg.mxu0
    %v2254 = vadd.f32 %v2064, %v2246
    %v2255 = vadd.f32 %v2065, %v2251
    %v2256 = vld [vmem:[%s1184 + $0xe6] sm:$0x1]
    %v2257 = vld [vmem:[%s1184 + $0xe7] sm:$0x1]
    %v2258 = vsel %vm79, %v2254, 0.0
    %2259 = vadd.xlane.f32.xlu0 %v2258
    %v2260 = vpop.xlane.xlu0 %2259
    %v2261 = vsel %vm79, %v2255, 0.0
    %2262 = vadd.xlane.f32.xlu0 %v2261
    %v2263 = vpop.xlane.xlu0 %2262
    %v2264 = vmul.f32 %v2260, 0.03125
    %v2265 = vmul.f32 %v2263, 0.03125
    %v2266 = vsub.f32 %v2254, %v2264
    %v2267 = vsub.f32 %v2255, %v2265
    %v2268 = vmul.f32 %v2266, %v2266
    %v2269 = vmul.f32 %v2267, %v2267
    %v2270 = vsel %vm79, %v2268, 0.0
    %2271 = vadd.xlane.f32.xlu0 %v2270
    %v2272 = vpop.xlane.xlu0 %2271
    %v2273 = vsel %vm79, %v2269, 0.0
    %2274 = vadd.xlane.f32.xlu0 %v2273
    %v2275 = vpop.xlane.xlu0 %2274
    %v2276 = vmul.f32 %v2272, 0.03125
    %v2277 = vmul.f32 %v2275, 0.03125
    %v2278 = vadd.f32 %v2276, 1e-05
    %v2279 = vadd.f32 %v2277, 1e-05
    %v2280 = vrsqrt.pop %v2278
    %v2281 = vrsqrt.pop %v2279
    %v2282 = vmul.f32 %v2266, %v2280
    %v2283 = vmul.f32 %v2267, %v2281
    %v2284 = vlaneseq
    %v2285 = vshrl.u32 %v2284, 7
    %v2286 = vsub.s32 0, %v2285
    %v2287 = vrot.slane %v2256, %v2286
    %v2288 = vmul.f32 %v2282, %v2287
    %v2289 = vmul.f32 %v2283, %v2287
    %v2290 = vlaneseq
    %v2291 = vshrl.u32 %v2290, 7
    %v2292 = vsub.s32 0, %v2291
    %v2293 = vrot.slane %v2257, %v2292
    %v2294 = vadd.f32 %v2288, %v2293
    %v2295 = vadd.f32 %v2289, %v2293
    %v2296 = vsel %vm79, %v2294, 0.0
    %v2297 = vrot.slane %v2296, 4
    %v2298 = vadd.f32 %v2296, %v2297
    %v2299 = vrot.slane %v2298, 2
    %v2300 = vadd.f32 %v2298, %v2299
    %v2301 = vrot.slane %v2300, 1
    %v2302 = vadd.f32 %v2300, %v2301
    %v2303 = vsel %vm79, %v2295, 0.0
    %v2304 = vrot.slane %v2303, 4
    %v2305 = vadd.f32 %v2303, %v2304
    %v2306 = vrot.slane %v2305, 2
    %v2307 = vadd.f32 %v2305, %v2306
    %v2308 = vrot.slane %v2307, 1
    %v2309 = vadd.f32 %v2307, %v2308
    %v2310 = vmul.f32 %v2302, 0.125
    %v2311 = vmul.f32 %v2309, 0.125
    %v2312 = vld [vmem:[#allocation7 + $0x50] sm:$0xff]
    %v2313 = vld [vmem:[#allocation7 + $0x58] sm:$0xff]
    %v2314 = vld [vmem:[#allocation7 + $0x60] sm:$0xff]
    %v2315 = vld [vmem:[#allocation7 + $0x68] sm:$0xff]
    %v2316 = vld [vmem:[#allocation7 + $0x70] sm:$0x1]
    %v2317 = vlaneseq
    %v2318 = vshrl.u32 %v2317, 7
    %v2319 = vsub.s32 0, %v2318
    %v2320 = vrot.slane %v2316, %v2319
    %vm2323 = vcmask 1041409
    %v2324 = vsel %vm2323, %v2311, %v2310
    %v2325 = vsel %vm79, %v2324, 0
    %2327 = vmatprep.subr.mxu0 0.0
    %2328 = vmatpush1.msra.mxu0 0.0
    %2329 = vmatprep.subr.mxu0 0.0
    %2330 = vmatpush1.msra.mxu0 0.0
    %2331 = vmatprep.subr.mxu0 0.0
    %2332 = vmatpush1.msra.mxu0 0.0
    %2333 = vmatprep.subr.mxu0 0.0
    %2334 = vmatpush1.msra.mxu0 0.0
    %2335 = vmatprep.subr.mxu0 0.0
    %2336 = vmatpush1.msra.mxu0 0.0
    %2337 = vmatprep.subr.mxu0 0.0
    %2338 = vmatpush1.msra.mxu0 0.0
    %2339 = vmatprep.subr.mxu0 0.0
    %2340 = vmatpush1.msra.mxu0 0.0
    %2341 = vmatprep.subr.mxu0 0.0
    %2342 = vmatpush1.msra.mxu0 0.0
    %2343 = vmatprep.subr.mxu0 0.0
    %2344 = vmatpush1.msra.mxu0 0.0
    %2345 = vmatprep.subr.mxu0 0.0
    %2346 = vmatpush1.msra.mxu0 0.0
    %2347 = vmatprep.subr.mxu0 0.0
    %2348 = vmatpush1.msra.mxu0 0.0
    %2349 = vmatprep.subr.mxu0 0.0
    %2350 = vmatpush1.msra.mxu0 0.0
    %2351 = vmatprep.subr.mxu0 0.0
    %2352 = vmatpush1.msra.mxu0 %v2315
    %2353 = vmatprep.subr.mxu0 0.0
    %2354 = vmatpush1.msra.mxu0 %v2314
    %2355 = vmatprep.subr.mxu0 0.0
    %2356 = vmatpush1.msra.mxu0 %v2313
    %2357 = vmatprep.subr.mxu0 0.0
    %2358 = vmatpush1.msra.mxu0 %v2312
    %2359 = vmatprep.subr.mxu0 0.0
    %2360 = vmatpush2.msra.mxu0 0.0
    %2361 = vmatprep.subr.mxu0 0.0
    %2362 = vmatpush2.msra.mxu0 0.0
    %2363 = vmatprep.subr.mxu0 0.0
    %2364 = vmatpush2.msra.mxu0 0.0
    %2365 = vmatprep.subr.mxu0 0.0
    %2366 = vmatpush2.msra.mxu0 0.0
    %2367 = vmatprep.subr.mxu0 0.0
    %2368 = vmatpush2.msra.mxu0 0.0
    %2369 = vmatprep.subr.mxu0 0.0
    %2370 = vmatpush2.msra.mxu0 0.0
    %2371 = vmatprep.subr.mxu0 0.0
    %2372 = vmatpush2.msra.mxu0 0.0
    %2373 = vmatprep.subr.mxu0 0.0
    %2374 = vmatpush2.msra.mxu0 0.0
    %2375 = vmatprep.subr.mxu0 0.0
    %2376 = vmatpush2.msra.mxu0 0.0
    %2377 = vmatprep.subr.mxu0 0.0
    %2378 = vmatpush2.msra.mxu0 0.0
    %2379 = vmatprep.subr.mxu0 0.0
    %2380 = vmatpush2.msra.mxu0 0.0
    %2381 = vmatprep.subr.mxu0 0.0
    %2382 = vmatpush2.msra.mxu0 0.0
    %2383 = vmatprep.subr.mxu0 0.0
    %2384 = vmatpush2.msra.mxu0 0.0
    %2385 = vmatprep.subr.mxu0 0.0
    %2386 = vmatpush2.msra.mxu0 0.0
    %2387 = vmatprep.subr.mxu0 0.0
    %2388 = vmatpush2.msra.mxu0 0.0
    %2389 = vmatprep.subr.mxu0 0.0
    %2390 = vmatpush2.msra.mxu0 0.0
    %2391 = vmatprep.mubr.f32.mxu0 0.0
    %2392 = vmatmul.mubr.f32.gmra.mxu0 %v2325
    %v2393 = vpop.f32.mrf.mxu0
    %v2394 = vadd.f32 %v2320, %v2393
    %v2395 = vpop.f32.mrf.mxu0
    %2396 = vdwg.mxu0
    %2397 = vst [vmem:[#allocation8] sm:$0x3] %v2394
    // Predicated region
    $region26: #{tpu_custom_call.1} parent=1 // pred_check
      _
    $region27: #{tpu_custom_call.1} parent=1 // pred_check_branch
      %2399 = sbr.rel (0) target = $region29
    $region28: #{tpu_custom_call.1} parent=1 // pred_region
      %s2401 = ssub.s32 32, 32
      %2402 = vsyncadd [#allocation4], %s2401
      %s2404 = sshll.u32 [#allocation8], 4
      %s2405 = int_to_ptr.vmem [resolvable:$true] %s2404
      %2407 = dma.vmem_to_hbm [thread:$0]  %s2405, 32, %s3, [#allocation4]
    $region29: #{tpu_custom_call.1} parent=1 // pred_fallthru
      _
    // Predicated region
    $region30: #{tpu_custom_call.1} parent=1 // pred_check
      _
    $region31: #{tpu_custom_call.1} parent=1 // pred_check_branch
      %2409 = sbr.rel (0) target = $region33
    $region32: #{tpu_custom_call.1} parent=1 // pred_region
      %2410 = dma.done [#allocation4], 32
    $region33: #{tpu_custom_call.1} parent=1 // pred_fallthru
      _
    %2411 = vsyncpa [#allocation3], 1
    %2412 = vsyncpa [#allocation6], 1
    %2413 = vsyncpa [#allocation4], 1

</llo_original>
